<compile_context>
chip_gen: v5e
topology: v5e:2x2
jax: 0.10.0
libtpu: 0.0.40
codegen_flags: <defaults>
</compile_context>

<pallas_src>
import functools
import math

import jax
import jax.numpy as jnp
from jax.experimental import pallas as pl
from jax.experimental.pallas import tpu as pltpu


_VMEM_LIMIT = 48 * 1024 * 1024   # scoped VMEM limit: safe on v5e/v6e and v7x (64 MiB phys)
_VMEM_BUDGET = 40 * 1024 * 1024  # planning budget for tile selection


def _round_up(x, m):
    return (x + m - 1) // m * m


# ----------------------------------------------------------------------------
# Kernels
# ----------------------------------------------------------------------------
def support_kernel(x_ref, w_ref, s_ref):
    """support = x @ W for one node-row tile (W resident across the grid)."""
    s_ref[...] = jnp.dot(
        x_ref[...], w_ref[...], preferred_element_type=jnp.float32
    ).astype(s_ref.dtype)


def _finalize(z, mode, n_valid, out_dtype):
    """Bias already added; apply activation (f32) and cast to output dtype."""
    if mode == "relu":
        return jnp.maximum(z, 0.0).astype(out_dtype)
    # log_softmax: mask padded class lanes so they don't perturb normalization.
    col = jax.lax.broadcasted_iota(jnp.int32, z.shape, 1)
    z = jnp.where(col < n_valid, z, -jnp.inf)
    m = jnp.max(z, axis=-1, keepdims=True)
    zc = z - m
    lse = jnp.log(jnp.sum(jnp.exp(zc), axis=-1, keepdims=True))
    return (zc - lse).astype(out_dtype)


def aggregate_fused_kernel(adj_ref, s_ref, b_ref, o_ref, *, mode, n_valid):
    """Collapsed-k: o = act(adj_strip @ s + b); s is fully VMEM-resident."""
    z = jnp.dot(adj_ref[...], s_ref[...], preferred_element_type=jnp.float32)
    z = z + b_ref[...]
    o_ref[...] = _finalize(z, mode, n_valid, o_ref.dtype)


def aggregate_stream_kernel(adj_ref, s_ref, b_ref, o_ref, acc_ref, *,
                            mode, n_valid, tk):
    """Streaming-k fallback: adj tiled over (i, k); s resident, sliced by k."""
    k = pl.program_id(1)

    @pl.when(k == 0)
    def _():
        acc_ref[...] = jnp.zeros_like(acc_ref)

    start = pl.multiple_of(k * tk, tk)
    acc_ref[...] += jnp.dot(
        adj_ref[...], s_ref[pl.ds(start, tk), :],
        preferred_element_type=jnp.float32,
    )

    @pl.when(k == pl.num_programs(1) - 1)
    def _():
        z = acc_ref[...] + b_ref[...]
        o_ref[...] = _finalize(z, mode, n_valid, o_ref.dtype)


# ----------------------------------------------------------------------------
# Tile planning
# ----------------------------------------------------------------------------
def _plan_row_tile(n, block_m):
    """Pad nodes to a 128-multiple only; pick the largest 128-multiple tile that
    divides n_pad, is <= block_m, and keeps >=2 row tiles (v7x megacore)."""
    n_pad = _round_up(n, 128)
    q = n_pad // 128
    best = 128
    for d in range(1, q + 1):
        t = 128 * d
        if t > block_m:
            break
        if n_pad % t == 0 and (n_pad // t >= 2 or q == 1):
            best = t
    return best, n_pad


def _support_tile(n_pad, f_pad, o):
    """Largest row tile for the support matmul that fits the VMEM budget and
    (when possible) leaves >=2 row tiles."""
    best = 128
    t = 128
    while t <= n_pad:
        if n_pad % t == 0 and (n_pad // t >= 2 or n_pad == 128):
            need = 2 * t * (f_pad + o) * 2 + f_pad * o * 2 + o * 4
            if need <= _VMEM_BUDGET:
                best = t
        t += 128
    return best


# ----------------------------------------------------------------------------
# pallas_call wrappers
# ----------------------------------------------------------------------------
def _dense_matmul(x, w, tm, out_dtype):
    """[N_pad, F] @ [F, O] -> [N_pad, O], tiled over node rows, W resident."""
    n_pad, f = x.shape
    o = w.shape[1]
    return pl.pallas_call(
        support_kernel,
        out_shape=jax.ShapeDtypeStruct((n_pad, o), out_dtype),
        grid_spec=pltpu.PrefetchScalarGridSpec(
            num_scalar_prefetch=0,
            grid=(n_pad // tm,),
            in_specs=[
                pl.BlockSpec((tm, f), lambda i: (i, 0)),
                pl.BlockSpec((f, o), lambda i: (0, 0)),  # resident weights
            ],
            out_specs=pl.BlockSpec((tm, o), lambda i: (i, 0)),
        ),
        compiler_params=pltpu.CompilerParams(
            dimension_semantics=("parallel",),
            vmem_limit_bytes=_VMEM_LIMIT,
        ),
        cost_estimate=pl.CostEstimate(
            flops=2 * n_pad * f * o,
            transcendentals=0,
            bytes_accessed=int(x.size * 2 + w.size * 2 + n_pad * o * 2),
        ),
    )(x, w)


def _aggregate(adj, s, b, tm, mode, n_valid, out_dtype, budget):
    """act(adj @ s + b).  Collapsed-k when the adj strip + resident s fit VMEM,
    else streaming-k with a VMEM f32 accumulator (s stays resident)."""
    n_pad = adj.shape[0]
    o = s.shape[1]
    out_bytes = jnp.dtype(out_dtype).itemsize

    collapsed_need = (2 * tm * n_pad * 2      # double-buffered adj strip (bf16)
                      + n_pad * o * 2         # resident support (bf16)
                      + 2 * tm * o * out_bytes
                      + 2 * o * 4)

    if collapsed_need <= budget:
        kern = functools.partial(aggregate_fused_kernel, mode=mode,
                                 n_valid=n_valid)
        grid = (n_pad // tm,)
        in_specs = [
            pl.BlockSpec((tm, n_pad), lambda i: (i, 0)),
            pl.BlockSpec((n_pad, o), lambda i: (0, 0)),   # resident support
            pl.BlockSpec((1, o), lambda i: (0, 0)),       # resident bias
        ]
        out_specs = pl.BlockSpec((tm, o), lambda i: (i, 0))
        scratch = []
        dims = ("parallel",)
    else:
        # TODO(synk): graphs large enough that even resident s (~n_pad*o*2B)
        # overflows VMEM would need a streamed-s variant; dense adj at that
        # scale is impractical anyway.
        tk = tm
        kern = functools.partial(aggregate_stream_kernel, mode=mode,
                                 n_valid=n_valid, tk=tk)
        grid = (n_pad // tm, n_pad // tk)
        in_specs = [
            pl.BlockSpec((tm, tk), lambda i, k: (i, k)),
            pl.BlockSpec((n_pad, o), lambda i, k: (0, 0)),  # resident support
            pl.BlockSpec((1, o), lambda i, k: (0, 0)),      # resident bias
        ]
        out_specs = pl.BlockSpec((tm, o), lambda i, k: (i, 0))
        scratch = [pltpu.VMEM((tm, o), jnp.float32)]
        dims = ("parallel", "arbitrary")

    return pl.pallas_call(
        kern,
        out_shape=jax.ShapeDtypeStruct((n_pad, o), out_dtype),
        grid_spec=pltpu.PrefetchScalarGridSpec(
            num_scalar_prefetch=0,
            grid=grid,
            in_specs=in_specs,
            out_specs=out_specs,
            scratch_shapes=scratch,
        ),
        compiler_params=pltpu.CompilerParams(
            dimension_semantics=dims,
            vmem_limit_bytes=_VMEM_LIMIT,
        ),
        cost_estimate=pl.CostEstimate(
            flops=2 * n_pad * n_pad * o,
            transcendentals=(n_pad * o if mode == "log_softmax" else 0),
            bytes_accessed=int(adj.size * 2 + s.size * 2
                               + n_pad * o * out_bytes),
        ),
    )(adj, s, b)


# ----------------------------------------------------------------------------
# One-time (static graph / params) preprocessing — hoisted out of the forward
# ----------------------------------------------------------------------------
def pad_adj(adj, n_pad):
    """Pad + bf16-cast the adjacency once; the graph is static across calls."""
    n = adj.shape[0]
    return jnp.pad(adj.astype(jnp.bfloat16), ((0, n_pad - n), (0, n_pad - n)))


def pad_params(w1, b1, w2, b2):
    """Pad weights/biases to lane-aligned (128) shapes once."""
    nfeat, nhid = w1.shape
    nclass = w2.shape[1]
    f_pad = _round_up(nfeat, 128)
    h_pad = _round_up(nhid, 128)
    c_pad = _round_up(nclass, 128)
    w1p = jnp.pad(w1.astype(jnp.bfloat16),
                  ((0, f_pad - nfeat), (0, h_pad - nhid)))
    w2p = jnp.pad(w2.astype(jnp.bfloat16),
                  ((0, h_pad - nhid), (0, c_pad - nclass)))
    b1p = jnp.pad(b1.reshape(1, -1).astype(jnp.float32),
                  ((0, 0), (0, h_pad - nhid)))
    b2p = jnp.pad(b2.reshape(1, -1).astype(jnp.float32),
                  ((0, 0), (0, c_pad - nclass)))
    return w1p, b1p, w2p, b2p


# ----------------------------------------------------------------------------
# Forward pass (adj / params already padded — see pad_adj / pad_params)
# ----------------------------------------------------------------------------
@functools.partial(
    jax.jit, static_argnames=("nhid", "nclass", "block_m", "agg_budget"))
def gcn_forward_padded(x, adjp, w1p, b1p, w2p, b2p, *, nhid, nclass,
                       block_m=256, agg_budget=_VMEM_BUDGET):
    n, nfeat = x.shape
    n_pad = adjp.shape[0]
    f_pad, h_pad = w1p.shape
    c_pad = w2p.shape[1]

    tm, n_pad_plan = _plan_row_tile(n, block_m)
    assert n_pad_plan == n_pad, "pad adj with pad_adj(adj, round_up(n, 128))"

    xp = jnp.pad(x.astype(jnp.bfloat16),
                 ((0, n_pad - n), (0, f_pad - nfeat)))

    # --- layer 1: h = relu(adj @ (x @ W1) + b1) ---
    s1 = _dense_matmul(xp, w1p, _support_tile(n_pad, f_pad, h_pad), jnp.bfloat16)
    h = _aggregate(adjp, s1, b1p, tm, "relu", nhid, jnp.bfloat16, agg_budget)

    # TODO(synk): training-mode dropout would need pltpu.prng_seed /
    # prng_random_bits with an explicit seed input; eval mode is the identity.

    # --- layer 2: log_softmax(adj @ (h @ W2) + b2, dim=1) ---
    s2 = _dense_matmul(h, w2p, _support_tile(n_pad, h_pad, c_pad), jnp.bfloat16)
    logp = _aggregate(adjp, s2, b2p, tm, "log_softmax", nclass, jnp.float32,
                      agg_budget)

    return logp[:n, :nclass]


# ----------------------------------------------------------------------------
# Params / reference
# ----------------------------------------------------------------------------
def init_gcn_params(key, nfeat, nhid, nclass):
    """pygcn-style uniform init: U(-1/sqrt(out), 1/sqrt(out))."""
    k1, k2, k3, k4 = jax.random.split(key, 4)
    s1 = 1.0 / jnp.sqrt(nhid)
    s2 = 1.0 / jnp.sqrt(nclass)
    w1 = jax.random.uniform(k1, (nfeat, nhid), jnp.float32, -s1, s1)
    b1 = jax.random.uniform(k2, (1, nhid), jnp.float32, -s1, s1)
    w2 = jax.random.uniform(k3, (nhid, nclass), jnp.float32, -s2, s2)
    b2 = jax.random.uniform(k4, (1, nclass), jnp.float32, -s2, s2)
    return w1, b1, w2, b2


def reference_forward(x, adj, w1, b1, w2, b2):
    """Pure-JAX reference mirroring the kernel's bf16 storage of heavy tensors."""
    q = lambda a: a.astype(jnp.bfloat16).astype(jnp.float32)
    xq, adjq, w1q, w2q = q(x), q(adj), q(w1), q(w2)
    s1 = q(xq @ w1q)
    h = q(jnp.maximum(adjq @ s1 + b1.reshape(1, -1), 0.0))
    s2 = q(h @ w2q)
    z = adjq @ s2 + b2.reshape(1, -1)
    return jax.nn.log_softmax(z, axis=1)


if __name__ == "__main__":
    # Small deterministic example (Cora-flavoured shapes, scaled down).
    N, NFEAT, NHID, NCLASS = 200, 48, 32, 7
    DROPOUT = 0.5  # unused in eval mode

    key = jax.random.PRNGKey(0)
    kx, kadj, kparams = jax.random.split(key, 3)

    x = jax.random.normal(kx, (N, NFEAT), dtype=jnp.float32)

    # Symmetric, row-normalized adjacency with self loops (typical GCN input).
    a = (jax.random.uniform(kadj, (N, N)) > 0.9).astype(jnp.float32)
    a = jnp.maximum(a, a.T) + jnp.eye(N, dtype=jnp.float32)
    adj = a / jnp.sum(a, axis=1, keepdims=True)

    w1, b1, w2, b2 = init_gcn_params(kparams, NFEAT, NHID, NCLASS)

    # One-time preprocessing (graph/params static): hoisted out of the forward.
    n_pad = _round_up(N, 128)
    adjp = pad_adj(adj, n_pad)
    w1p, b1p, w2p, b2p = pad_params(w1, b1, w2, b2)

    ref = reference_forward(x, adj, w1, b1, w2, b2)

    # Default path: collapsed-k aggregate (single MXU pass per row tile),
    # VMEM-resident support, 2 row tiles of 128 for this small graph.
    out = gcn_forward_padded(x, adjp, w1p, b1p, w2p, b2p,
                             nhid=NHID, nclass=NCLASS, block_m=256)
    out = jax.block_until_ready(out)
    assert out.shape == (N, NCLASS)
    assert bool(jnp.all(jnp.isfinite(out))), "non-finite values in output"
    err = float(jnp.max(jnp.abs(out - ref)))
    assert jnp.allclose(out, ref, atol=2e-2, rtol=2e-2), \
        f"collapsed path mismatch vs ref: {err}"

    # Also exercise the streaming-k fallback (tiny planning budget forces it).
    out2 = gcn_forward_padded(x, adjp, w1p, b1p, w2p, b2p,
                              nhid=NHID, nclass=NCLASS, block_m=256,
                              agg_budget=1)
    out2 = jax.block_until_ready(out2)
    err2 = float(jnp.max(jnp.abs(out2 - ref)))
    assert jnp.allclose(out2, ref, atol=2e-2, rtol=2e-2), \
        f"streaming path mismatch vs ref: {err2}"

    print("KERNEL_OK")
</pallas_src>

<mosaic_0001>
module attributes {stable_mosaic.version = 11 : i64} {
  func.func @support_kernel(%arg0: i32, %arg1: memref<128x128xbf16, #tpu.memory_space<vmem>>, %arg2: memref<128x128xbf16, #tpu.memory_space<vmem>>, %arg3: memref<128x128xbf16, #tpu.memory_space<vmem>>) attributes {dimension_semantics = [#tpu.dimension_semantics<parallel>], iteration_bounds = array<i64: 2>, scalar_prefetch = 0 : i64, scratch_operands = 0 : i64, tpu.core_type = #tpu.core_type<tc>, window_params = [{transform_indices = @transform_0, window_bounds = array<i64: 128, 128>}, {pipeline_mode = #tpu.pipeline_mode<synchronous>, transform_indices = @transform_1, window_bounds = array<i64: 128, 128>}, {transform_indices = @transform_2, window_bounds = array<i64: 128, 128>}]} {
    %c0 = arith.constant 0 : index
    %c0_0 = arith.constant 0 : index
    %0 = vector.load %arg1[%c0, %c0_0] : memref<128x128xbf16, #tpu.memory_space<vmem>>, vector<128x128xbf16>
    %c0_1 = arith.constant 0 : index
    %c0_2 = arith.constant 0 : index
    %1 = vector.load %arg2[%c0_1, %c0_2] : memref<128x128xbf16, #tpu.memory_space<vmem>>, vector<128x128xbf16>
    %cst = arith.constant dense<0.000000e+00> : vector<128x128xf32>
    %2 = tpu.matmul %0, %1, %cst {dimension_numbers = #tpu.dot_dimension_numbers<[1], [0], [0], [1], [0, 0, 1, 1], [], []>} : vector<128x128xbf16>, vector<128x128xbf16>, vector<128x128xf32> -> vector<128x128xf32>
    %3 = arith.truncf %2 : vector<128x128xf32> to vector<128x128xbf16>
    %c0_3 = arith.constant 0 : index
    %c0_4 = arith.constant 0 : index
    %4 = vector.load %arg3[%c0_3, %c0_4] : memref<128x128xbf16, #tpu.memory_space<vmem>>, vector<128x128xbf16>
    tpu.vector_store %arg3[%c0_3, %c0_4], %3 {strides = array<i32>} : memref<128x128xbf16, #tpu.memory_space<vmem>>, vector<128x128xbf16>,
    return
  }
  func.func @transform_0(%arg0: i32) -> (i32, i32) {
    %c0_i32 = arith.constant 0 : i32
    %c0_i32_0 = arith.constant 0 : i32
    return %arg0, %c0_i32 : i32, i32
  }
  func.func @transform_1(%arg0: i32) -> (i32, i32) {
    %c0_i32 = arith.constant 0 : i32
    %c0_i32_0 = arith.constant 0 : i32
    %c0_i32_1 = arith.constant 0 : i32
    return %c0_i32, %c0_i32_0 : i32, i32
  }
  func.func @transform_2(%arg0: i32) -> (i32, i32) {
    %c0_i32 = arith.constant 0 : i32
    %c0_i32_0 = arith.constant 0 : i32
    return %arg0, %c0_i32 : i32, i32
  }
}

module attributes {stable_mosaic.version = 11 : i64} {
  func.func @aggregate_fused_kernel(%arg0: i32, %arg1: memref<128x256xbf16, #tpu.memory_space<vmem>>, %arg2: memref<256x128xbf16, #tpu.memory_space<vmem>>, %arg3: memref<1x128xf32, #tpu.memory_space<vmem>>, %arg4: memref<128x128xbf16, #tpu.memory_space<vmem>>) attributes {dimension_semantics = [#tpu.dimension_semantics<parallel>], iteration_bounds = array<i64: 2>, scalar_prefetch = 0 : i64, scratch_operands = 0 : i64, tpu.core_type = #tpu.core_type<tc>, window_params = [{transform_indices = @transform_0, window_bounds = array<i64: 128, 256>}, {pipeline_mode = #tpu.pipeline_mode<synchronous>, transform_indices = @transform_1, window_bounds = array<i64: 256, 128>}, {pipeline_mode = #tpu.pipeline_mode<synchronous>, transform_indices = @transform_2, window_bounds = array<i64: 1, 128>}, {transform_indices = @transform_3, window_bounds = array<i64: 128, 128>}]} {
    %c0 = arith.constant 0 : index
    %c0_0 = arith.constant 0 : index
    %0 = vector.load %arg1[%c0, %c0_0] : memref<128x256xbf16, #tpu.memory_space<vmem>>, vector<128x256xbf16>
    %c0_1 = arith.constant 0 : index
    %c0_2 = arith.constant 0 : index
    %1 = vector.load %arg2[%c0_1, %c0_2] : memref<256x128xbf16, #tpu.memory_space<vmem>>, vector<256x128xbf16>
    %cst = arith.constant dense<0.000000e+00> : vector<128x128xf32>
    %2 = tpu.matmul %0, %1, %cst {dimension_numbers = #tpu.dot_dimension_numbers<[1], [0], [0], [1], [0, 0, 1, 1], [], []>} : vector<128x256xbf16>, vector<256x128xbf16>, vector<128x128xf32> -> vector<128x128xf32>
    %c0_3 = arith.constant 0 : index
    %c0_4 = arith.constant 0 : index
    %3 = vector.load %arg3[%c0_3, %c0_4] : memref<1x128xf32, #tpu.memory_space<vmem>>, vector<1x128xf32>
    %4 = vector.broadcast %3 : vector<1x128xf32> to vector<128x128xf32>
    %5 = arith.addf %2, %4 : vector<128x128xf32>
    %cst_5 = arith.constant 0.000000e+00 : f32
    %6 = vector.broadcast %cst_5 : f32 to vector<128x128xf32>
    %7 = arith.maximumf %5, %6 : vector<128x128xf32>
    %8 = arith.truncf %7 : vector<128x128xf32> to vector<128x128xbf16>
    %c0_6 = arith.constant 0 : index
    %c0_7 = arith.constant 0 : index
    %9 = vector.load %arg4[%c0_6, %c0_7] : memref<128x128xbf16, #tpu.memory_space<vmem>>, vector<128x128xbf16>
    tpu.vector_store %arg4[%c0_6, %c0_7], %8 {strides = array<i32>} : memref<128x128xbf16, #tpu.memory_space<vmem>>, vector<128x128xbf16>,
    return
  }
  func.func @transform_0(%arg0: i32) -> (i32, i32) {
    %c0_i32 = arith.constant 0 : i32
    %c0_i32_0 = arith.constant 0 : i32
    return %arg0, %c0_i32 : i32, i32
  }
  func.func @transform_1(%arg0: i32) -> (i32, i32) {
    %c0_i32 = arith.constant 0 : i32
    %c0_i32_0 = arith.constant 0 : i32
    %c0_i32_1 = arith.constant 0 : i32
    return %c0_i32, %c0_i32_0 : i32, i32
  }
  func.func @transform_2(%arg0: i32) -> (i32, i32) {
    %c0_i32 = arith.constant 0 : i32
    %c0_i32_0 = arith.constant 0 : i32
    %c0_i32_1 = arith.constant 0 : i32
    return %c0_i32, %c0_i32_0 : i32, i32
  }
  func.func @transform_3(%arg0: i32) -> (i32, i32) {
    %c0_i32 = arith.constant 0 : i32
    %c0_i32_0 = arith.constant 0 : i32
    return %arg0, %c0_i32 : i32, i32
  }
}

module attributes {stable_mosaic.version = 11 : i64} {
  func.func @aggregate_fused_kernel(%arg0: i32, %arg1: memref<128x256xbf16, #tpu.memory_space<vmem>>, %arg2: memref<256x128xbf16, #tpu.memory_space<vmem>>, %arg3: memref<1x128xf32, #tpu.memory_space<vmem>>, %arg4: memref<128x128xf32, #tpu.memory_space<vmem>>) attributes {dimension_semantics = [#tpu.dimension_semantics<parallel>], iteration_bounds = array<i64: 2>, scalar_prefetch = 0 : i64, scratch_operands = 0 : i64, tpu.core_type = #tpu.core_type<tc>, window_params = [{transform_indices = @transform_0, window_bounds = array<i64: 128, 256>}, {pipeline_mode = #tpu.pipeline_mode<synchronous>, transform_indices = @transform_1, window_bounds = array<i64: 256, 128>}, {pipeline_mode = #tpu.pipeline_mode<synchronous>, transform_indices = @transform_2, window_bounds = array<i64: 1, 128>}, {transform_indices = @transform_3, window_bounds = array<i64: 128, 128>}]} {
    %c0 = arith.constant 0 : index
    %c0_0 = arith.constant 0 : index
    %0 = vector.load %arg1[%c0, %c0_0] : memref<128x256xbf16, #tpu.memory_space<vmem>>, vector<128x256xbf16>
    %c0_1 = arith.constant 0 : index
    %c0_2 = arith.constant 0 : index
    %1 = vector.load %arg2[%c0_1, %c0_2] : memref<256x128xbf16, #tpu.memory_space<vmem>>, vector<256x128xbf16>
    %cst = arith.constant dense<0.000000e+00> : vector<128x128xf32>
    %2 = tpu.matmul %0, %1, %cst {dimension_numbers = #tpu.dot_dimension_numbers<[1], [0], [0], [1], [0, 0, 1, 1], [], []>} : vector<128x256xbf16>, vector<256x128xbf16>, vector<128x128xf32> -> vector<128x128xf32>
    %c0_3 = arith.constant 0 : index
    %c0_4 = arith.constant 0 : index
    %3 = vector.load %arg3[%c0_3, %c0_4] : memref<1x128xf32, #tpu.memory_space<vmem>>, vector<1x128xf32>
    %4 = vector.broadcast %3 : vector<1x128xf32> to vector<128x128xf32>
    %5 = arith.addf %2, %4 : vector<128x128xf32>
    %6 = tpu.iota {dimensions = array<i32: 1>} : vector<128x128xi32>
    %c7_i32 = arith.constant 7 : i32
    %7 = vector.broadcast %c7_i32 : i32 to vector<128x128xi32>
    %8 = arith.cmpi slt, %6, %7 : vector<128x128xi32>
    %cst_5 = arith.constant 0xFF800000 : f32
    %9 = vector.broadcast %cst_5 : f32 to vector<128x128xf32>
    %10 = arith.select %8, %5, %9 : vector<128x128xi1>, vector<128x128xf32>
    %cst_6 = arith.constant dense<0xFF800000> : vector<128xf32>
    %11 = vector.multi_reduction <maximumf>, %10, %cst_6 [1] : vector<128x128xf32> to vector<128xf32>
    %12 = vector.shape_cast %11 : vector<128xf32> to vector<128x1xf32>
    %13 = vector.broadcast %12 : vector<128x1xf32> to vector<128x128xf32>
    %14 = arith.subf %10, %13 : vector<128x128xf32>
    %15 = math.exp %14 : vector<128x128xf32>
    %cst_7 = arith.constant dense<0.000000e+00> : vector<128xf32>
    %16 = vector.multi_reduction <add>, %15, %cst_7 [1] : vector<128x128xf32> to vector<128xf32>
    %17 = vector.shape_cast %16 : vector<128xf32> to vector<128x1xf32>
    %18 = math.log %17 : vector<128x1xf32>
    %19 = vector.broadcast %18 : vector<128x1xf32> to vector<128x128xf32>
    %20 = arith.subf %14, %19 : vector<128x128xf32>
    %c0_8 = arith.constant 0 : index
    %c0_9 = arith.constant 0 : index
    %21 = vector.load %arg4[%c0_8, %c0_9] : memref<128x128xf32, #tpu.memory_space<vmem>>, vector<128x128xf32>
    tpu.vector_store %arg4[%c0_8, %c0_9], %20 {strides = array<i32>} : memref<128x128xf32, #tpu.memory_space<vmem>>, vector<128x128xf32>,
    return
  }
  func.func @transform_0(%arg0: i32) -> (i32, i32) {
    %c0_i32 = arith.constant 0 : i32
    %c0_i32_0 = arith.constant 0 : i32
    return %arg0, %c0_i32 : i32, i32
  }
  func.func @transform_1(%arg0: i32) -> (i32, i32) {
    %c0_i32 = arith.constant 0 : i32
    %c0_i32_0 = arith.constant 0 : i32
    %c0_i32_1 = arith.constant 0 : i32
    return %c0_i32, %c0_i32_0 : i32, i32
  }
  func.func @transform_2(%arg0: i32) -> (i32, i32) {
    %c0_i32 = arith.constant 0 : i32
    %c0_i32_0 = arith.constant 0 : i32
    %c0_i32_1 = arith.constant 0 : i32
    return %c0_i32, %c0_i32_0 : i32, i32
  }
  func.func @transform_3(%arg0: i32) -> (i32, i32) {
    %c0_i32 = arith.constant 0 : i32
    %c0_i32_0 = arith.constant 0 : i32
    return %arg0, %c0_i32 : i32, i32
  }
}

</mosaic_0001>

<llo_original>
// kernel: gcn_forward_padded.4
$region0: #{gcn_forward_padded.4}
  #allocation0 [shape = 'u32[]', space=smem, size = 0x4, offset = 0x4, fixed_abs, tag = 'smem constant byte address 0x4 - core index']
  #allocation1 [shape = 'u32[72,128]{1,0:T(1,128)}', space=vmem, size = 0x9000, scoped, tag = 'internal scratch']
  %s0 = inlined_call_operand.vmem [shape: bf16[256,128], index: 0, kind: input, shape index: {}]
  %s1 = inlined_call_operand.vmem [shape: bf16[128,128], index: 1, kind: input, shape index: {}]
  %s2 = inlined_call_operand.vmem [shape: bf16[256,128], index: 2, kind: output, shape index: {}]
  %s3 = sld [smem:[#allocation0]]
  $region41: #{gcn_forward_padded.4} parent=0
    _
  %s5 = ssub.s32 1, %s3
  %s6 = scalar_select 0, %s5, %s3
  loop: start=0, step=1, limit=4
  $region2: #{gcn_forward_padded.4} parent=0 // loop_pre_header
    _
  $region3: #{gcn_forward_padded.4} parent=0 // loop_header
    %s8 = sphi 0, %s12
    %p9 = scmp.ge.s32.totalorder %s8, 4
    %s18 = sphi 0, %s20
    %s21 = sphi 0, %s18
    %s22 = sphi 0, %s21
    %s38 = sphi 0, %s22
    %s42 = sphi 0, %s42
    %s44 = sphi 0, %s42
    %s45 = sphi 0, %s44
    %s59 = sphi 0, %s45
    %s65 = sphi 0, %s67
    %s68 = sphi 0, %s65
    %s69 = sphi 0, %s68
    %s85 = sphi 0, %s69
  $region4: #{gcn_forward_padded.4} parent=0 // loop_header_branch
    %11 = sbr.rel (%p9) target = $region8
  $region5: #{gcn_forward_padded.4} parent=0 // loop_body
    %s13 = ssub.s32 %s8, 1
    %s14 = ssub.s32 %s8, 2
    %s15 = sadd.s32 %s8, 1
    %s16 = ssub.s32 %s8, %s15
    %p17 = scmp.eq.s32.totalorder %s16, 0
    %s19 = sadd.s32 %s18, 1
    %s20 = scalar_select %p17, %s18, %s19
    %p23 = pneg %p17
    %p24 = scmp.eq.s32.totalorder %s8, 1
    %p25 = por %p23, %p24
    %p26 = scmp.ne.s32.totalorder %s18, %s21
    %p27 = scmp.eq.s32.totalorder %s8, 0
    %p28 = por %p26, %p27
    %p29 = scmp.ne.s32.totalorder %s18, %s21
    %p30 = scmp.eq.s32.totalorder %s13, 1
    %p31 = por %p29, %p30
    %p32 = scmp.ne.s32.totalorder %s21, %s22
    %p33 = scmp.eq.s32.totalorder %s13, 0
    %p34 = por %p32, %p33
    %p35 = scmp.ne.s32.totalorder %s21, %s22
    %p36 = scmp.eq.s32.totalorder %s14, 1
    %p37 = por %p35, %p36
    %p39 = scmp.ne.s32.totalorder %s22, %s38
    %p40 = scmp.eq.s32.totalorder %s14, 0
    %p41 = por %p39, %p40
    %s43 = sadd.s32 %s42, 1
    %p46 = scmp.eq.s32.totalorder %s8, 1
    %p47 = scmp.ne.s32.totalorder %s42, %s44
    %p48 = scmp.eq.s32.totalorder %s8, 0
    %p49 = por %p47, %p48
    %p50 = scmp.ne.s32.totalorder %s42, %s44
    %p51 = scmp.eq.s32.totalorder %s13, 1
    %p52 = por %p50, %p51
    %p53 = scmp.ne.s32.totalorder %s44, %s45
    %p54 = scmp.eq.s32.totalorder %s13, 0
    %p55 = por %p53, %p54
    %p56 = scmp.ne.s32.totalorder %s44, %s45
    %p57 = scmp.eq.s32.totalorder %s14, 1
    %p58 = por %p56, %p57
    %p60 = scmp.ne.s32.totalorder %s45, %s59
    %p61 = scmp.eq.s32.totalorder %s14, 0
    %p62 = por %p60, %p61
    %s63 = ssub.s32 %s8, %s15
    %p64 = scmp.eq.s32.totalorder %s63, 0
    %s66 = sadd.s32 %s65, 1
    %s67 = scalar_select %p64, %s65, %s66
    %p70 = pneg %p64
    %p71 = scmp.eq.s32.totalorder %s8, 1
    %p72 = por %p70, %p71
    %p73 = scmp.ne.s32.totalorder %s65, %s68
    %p74 = scmp.eq.s32.totalorder %s8, 0
    %p75 = por %p73, %p74
    %p76 = scmp.ne.s32.totalorder %s65, %s68
    %p77 = scmp.eq.s32.totalorder %s13, 1
    %p78 = por %p76, %p77
    %p79 = scmp.ne.s32.totalorder %s68, %s69
    %p80 = scmp.eq.s32.totalorder %s13, 0
    %p81 = por %p79, %p80
    %p82 = scmp.ne.s32.totalorder %s68, %s69
    %p83 = scmp.eq.s32.totalorder %s14, 1
    %p84 = por %p82, %p83
    %p86 = scmp.ne.s32.totalorder %s69, %s85
    %p87 = scmp.eq.s32.totalorder %s14, 0
    %p88 = por %p86, %p87
    %p89 = scmp.le.s32.totalorder 1, %s8
    %p90 = scmp.lt.s32.totalorder %s8, 3
    %p91 = pnand %p89, %p90
    %p92 = pneg %p91
    // Predicated region
    $region9: #{gcn_forward_padded.4} parent=5 // pred_check
      _
    $region10: #{gcn_forward_padded.4} parent=5 // pred_check_branch
      %94 = sbr.rel (%p91) target = $region12
    $region11: #{gcn_forward_padded.4} parent=5 // pred_region
      %s95 = ssub.s32 %s8, 1
      // Predicated region
      $region13: #{gcn_forward_padded.4} parent=11 // pred_check
        %p96 = pneg %p55
      $region14: #{gcn_forward_padded.4} parent=11 // pred_check_branch
        %98 = sbr.rel (%p96) target = $region16
      $region15: #{gcn_forward_padded.4} parent=11 // pred_region
        _
      $region16: #{gcn_forward_padded.4} parent=11 // pred_fallthru
        _
    $region12: #{gcn_forward_padded.4} parent=5 // pred_fallthru
      _
    %p99 = scmp.lt.s32.totalorder %s8, 2
    // Predicated region
    $region17: #{gcn_forward_padded.4} parent=5 // pred_check
      %p100 = pneg %p99
    $region18: #{gcn_forward_padded.4} parent=5 // pred_check_branch
      %102 = sbr.rel (%p100) target = $region20
    $region19: #{gcn_forward_padded.4} parent=5 // pred_region
      // Predicated region
      $region21: #{gcn_forward_padded.4} parent=19 // pred_check
        %p103 = pneg %p28
      $region22: #{gcn_forward_padded.4} parent=19 // pred_check_branch
        %105 = sbr.rel (%p103) target = $region24
      $region23: #{gcn_forward_padded.4} parent=19 // pred_region
        %s106 = smul.u32 16, %s8
        %p107 = scmp.lt.s32.totalorder %s106, 31
        %s108 = scalar_select %p107, %s106, 31
        %s109 = smul.addr %s108, 4
        %s110 = scalar_lea.vmem %s0, %s109
        %s111 = smul.u32 16, %s8
      $region24: #{gcn_forward_padded.4} parent=19 // pred_fallthru
        _
    $region20: #{gcn_forward_padded.4} parent=5 // pred_fallthru
      _
    %p112 = scmp.le.s32.totalorder 1, %s8
    %p113 = scmp.lt.s32.totalorder %s8, 3
    %p114 = pnand %p112, %p113
    %p115 = pneg %p114
    // Predicated region
    $region25: #{gcn_forward_padded.4} parent=5 // pred_check
      _
    $region26: #{gcn_forward_padded.4} parent=5 // pred_check_branch
      %117 = sbr.rel (%p114) target = $region28
    $region27: #{gcn_forward_padded.4} parent=5 // pred_region
      %s118 = ssub.s32 %s8, 1
      %s119 = smul.u32 16, %s13
      %p120 = scmp.lt.s32.totalorder %s119, 31
      %s121 = scalar_select %p120, %s119, 31
      %s122 = smul.addr %s121, 4
      %s123 = scalar_lea.vmem %s0, %s122
      %p124 = pneg %p34
      %p125 = pneg %p31
      %p126 = pneg %p55
      %p127 = pneg %p52
      %p128 = pneg %p81
      %p129 = pneg %p78
      %s130 = smul.u32 16, %s13
      %p131 = scmp.lt.s32.totalorder %s130, 31
      %s132 = scalar_select %p131, %s130, 31
      %s133 = smul.addr %s132, 4
      %s134 = scalar_lea.vmem %s2, %s133
      %s135 = smul.u32 16, %s13
      %p136 = scmp.lt.s32.totalorder %s135, 31
      %s137 = scalar_select %p136, %s135, 31
      %s138 = smul.addr %s137, 4
      %s139 = scalar_lea.vmem %s0, %s138
      %s140 = smul.u32 16, %s13
      %s141 = smul.u32 16, %s13
      %p142 = scmp.lt.s32.totalorder %s141, 31
      %s143 = scalar_select %p142, %s141, 31
      %s144 = smul.addr %s143, 4
      %s145 = scalar_lea.vmem %s2, %s144
      %s146 = smul.u32 16, %s13
      %v147 = vld [vmem:[%s139] sm:$0xf]
      %v148 = vld [vmem:[%s139 + $0x4] sm:$0xf]
      %v149 = vld [vmem:[%s139 + $0x8] sm:$0xf]
      %v150 = vld [vmem:[%s139 + $0xc] sm:$0xf]
      %v151 = vld [vmem:[%s139 + $0x10] sm:$0xf]
      %v152 = vld [vmem:[%s139 + $0x14] sm:$0xf]
      %v153 = vld [vmem:[%s139 + $0x18] sm:$0xf]
      %v154 = vld [vmem:[%s139 + $0x1c] sm:$0xf]
      %v155 = vld [vmem:[%s139 + $0x20] sm:$0xf]
      %v156 = vld [vmem:[%s139 + $0x24] sm:$0xf]
      %v157 = vld [vmem:[%s139 + $0x28] sm:$0xf]
      %v158 = vld [vmem:[%s139 + $0x2c] sm:$0xf]
      %v159 = vld [vmem:[%s139 + $0x30] sm:$0xf]
      %v160 = vld [vmem:[%s139 + $0x34] sm:$0xf]
      %v161 = vld [vmem:[%s139 + $0x38] sm:$0xf]
      %v162 = vld [vmem:[%s139 + $0x3c] sm:$0xf]
      %v163 = vld [vmem:[%s1] sm:$0xf]
      %v164 = vld [vmem:[%s1 + $0x4] sm:$0xf]
      %v165 = vld [vmem:[%s1 + $0x8] sm:$0xf]
      %v166 = vld [vmem:[%s1 + $0xc] sm:$0xf]
      %v167 = vld [vmem:[%s1 + $0x10] sm:$0xf]
      %v168 = vld [vmem:[%s1 + $0x14] sm:$0xf]
      %v169 = vld [vmem:[%s1 + $0x18] sm:$0xf]
      %v170 = vld [vmem:[%s1 + $0x1c] sm:$0xf]
      %v171 = vld [vmem:[%s1 + $0x20] sm:$0xf]
      %v172 = vld [vmem:[%s1 + $0x24] sm:$0xf]
      %v173 = vld [vmem:[%s1 + $0x28] sm:$0xf]
      %v174 = vld [vmem:[%s1 + $0x2c] sm:$0xf]
      %v175 = vld [vmem:[%s1 + $0x30] sm:$0xf]
      %v176 = vld [vmem:[%s1 + $0x34] sm:$0xf]
      %v177 = vld [vmem:[%s1 + $0x38] sm:$0xf]
      %v178 = vld [vmem:[%s1 + $0x3c] sm:$0xf]
      %v195 = vunpack.c.l.b16 %v147
      %v196 = vunpack.c.l.b16 %v148
      %v197 = vunpack.c.l.b16 %v149
      %v198 = vunpack.c.l.b16 %v150
      %v199 = vunpack.c.l.b16 %v151
      %v200 = vunpack.c.l.b16 %v152
      %v201 = vunpack.c.l.b16 %v153
      %v202 = vunpack.c.l.b16 %v154
      %v203 = vunpack.c.l.b16 %v155
      %v204 = vunpack.c.l.b16 %v156
      %v205 = vunpack.c.l.b16 %v157
      %v206 = vunpack.c.l.b16 %v158
      %v207 = vunpack.c.l.b16 %v159
      %v208 = vunpack.c.l.b16 %v160
      %v209 = vunpack.c.l.b16 %v161
      %v210 = vunpack.c.l.b16 %v162
      %v211 = vpack.c.b16 %v196, %v195
      %v212 = vpack.c.b16 %v198, %v197
      %v213 = vpack.c.b16 %v200, %v199
      %v214 = vpack.c.b16 %v202, %v201
      %v215 = vpack.c.b16 %v204, %v203
      %v216 = vpack.c.b16 %v206, %v205
      %v217 = vpack.c.b16 %v208, %v207
      %v218 = vpack.c.b16 %v210, %v209
      %v243 = vunpack.c.l.b16 %v163
      %v244 = vunpack.c.l.b16 %v164
      %v245 = vunpack.c.l.b16 %v165
      %v246 = vunpack.c.l.b16 %v166
      %v247 = vunpack.c.l.b16 %v167
      %v248 = vunpack.c.l.b16 %v168
      %v249 = vunpack.c.l.b16 %v169
      %v250 = vunpack.c.l.b16 %v170
      %v251 = vunpack.c.l.b16 %v171
      %v252 = vunpack.c.l.b16 %v172
      %v253 = vunpack.c.l.b16 %v173
      %v254 = vunpack.c.l.b16 %v174
      %v255 = vunpack.c.l.b16 %v175
      %v256 = vunpack.c.l.b16 %v176
      %v257 = vunpack.c.l.b16 %v177
      %v258 = vunpack.c.l.b16 %v178
      %v259 = vpack.c.b16 %v244, %v243
      %v260 = vpack.c.b16 %v246, %v245
      %v261 = vpack.c.b16 %v248, %v247
      %v262 = vpack.c.b16 %v250, %v249
      %v263 = vpack.c.b16 %v252, %v251
      %v264 = vpack.c.b16 %v254, %v253
      %v265 = vpack.c.b16 %v256, %v255
      %v266 = vpack.c.b16 %v258, %v257
      %275 = vmatpush.bf16.msra.mxu0 %v266
      %276 = vmatpush.bf16.msra.mxu0 %v265
      %277 = vmatpush.bf16.msra.mxu0 %v264
      %278 = vmatpush.bf16.msra.mxu0 %v263
      %279 = vmatpush.bf16.msra.mxu0 %v262
      %280 = vmatpush.bf16.msra.mxu0 %v261
      %281 = vmatpush.bf16.msra.mxu0 %v260
      %282 = vmatpush.bf16.msra.mxu0 %v259
      %283 = vmatmul.bf16.gmra.mxu0 %v211
      %v284 = vpop.f32.mrf.mxu0
      %v285 = vadd.f32 0.0, %v284
      %v286 = vpop.f32.mrf.mxu0
      %v287 = vadd.f32 0.0, %v286
      %288 = vmatmul.bf16.gmra.mxu0 %v212
      %v289 = vpop.f32.mrf.mxu0
      %v290 = vadd.f32 0.0, %v289
      %v291 = vpop.f32.mrf.mxu0
      %v292 = vadd.f32 0.0, %v291
      %293 = vmatmul.bf16.gmra.mxu0 %v213
      %v294 = vpop.f32.mrf.mxu0
      %v295 = vadd.f32 0.0, %v294
      %v296 = vpop.f32.mrf.mxu0
      %v297 = vadd.f32 0.0, %v296
      %298 = vmatmul.bf16.gmra.mxu0 %v214
      %v299 = vpop.f32.mrf.mxu0
      %v300 = vadd.f32 0.0, %v299
      %v301 = vpop.f32.mrf.mxu0
      %v302 = vadd.f32 0.0, %v301
      %303 = vmatmul.bf16.gmra.mxu0 %v215
      %v304 = vpop.f32.mrf.mxu0
      %v305 = vadd.f32 0.0, %v304
      %v306 = vpop.f32.mrf.mxu0
      %v307 = vadd.f32 0.0, %v306
      %308 = vmatmul.bf16.gmra.mxu0 %v216
      %v309 = vpop.f32.mrf.mxu0
      %v310 = vadd.f32 0.0, %v309
      %v311 = vpop.f32.mrf.mxu0
      %v312 = vadd.f32 0.0, %v311
      %313 = vmatmul.bf16.gmra.mxu0 %v217
      %v314 = vpop.f32.mrf.mxu0
      %v315 = vadd.f32 0.0, %v314
      %v316 = vpop.f32.mrf.mxu0
      %v317 = vadd.f32 0.0, %v316
      %318 = vmatmul.bf16.gmra.mxu0 %v218
      %v319 = vpop.f32.mrf.mxu0
      %v320 = vadd.f32 0.0, %v319
      %v321 = vpop.f32.mrf.mxu0
      %v322 = vadd.f32 0.0, %v321
      %323 = vdwg.mxu0
      %v324 = vpack.c.bf16 %v285, %v285
      %v325 = vpack.c.bf16 %v287, %v287
      %v326 = vpack.c.bf16 %v290, %v290
      %v327 = vpack.c.bf16 %v292, %v292
      %v328 = vpack.c.bf16 %v295, %v295
      %v329 = vpack.c.bf16 %v297, %v297
      %v330 = vpack.c.bf16 %v300, %v300
      %v331 = vpack.c.bf16 %v302, %v302
      %v332 = vpack.c.bf16 %v305, %v305
      %v333 = vpack.c.bf16 %v307, %v307
      %v334 = vpack.c.bf16 %v310, %v310
      %v335 = vpack.c.bf16 %v312, %v312
      %v336 = vpack.c.bf16 %v315, %v315
      %v337 = vpack.c.bf16 %v317, %v317
      %v338 = vpack.c.bf16 %v320, %v320
      %v339 = vpack.c.bf16 %v322, %v322
      %340 = vst [vmem:[%s145] sm:$0xf] %v324
      %341 = vst [vmem:[%s145 + $0x4] sm:$0xf] %v325
      %342 = vst [vmem:[%s145 + $0x8] sm:$0xf] %v326
      %343 = vst [vmem:[%s145 + $0xc] sm:$0xf] %v327
      %344 = vst [vmem:[%s145 + $0x10] sm:$0xf] %v328
      %345 = vst [vmem:[%s145 + $0x14] sm:$0xf] %v329
      %346 = vst [vmem:[%s145 + $0x18] sm:$0xf] %v330
      %347 = vst [vmem:[%s145 + $0x1c] sm:$0xf] %v331
      %348 = vst [vmem:[%s145 + $0x20] sm:$0xf] %v332
      %349 = vst [vmem:[%s145 + $0x24] sm:$0xf] %v333
      %350 = vst [vmem:[%s145 + $0x28] sm:$0xf] %v334
      %351 = vst [vmem:[%s145 + $0x2c] sm:$0xf] %v335
      %352 = vst [vmem:[%s145 + $0x30] sm:$0xf] %v336
      %353 = vst [vmem:[%s145 + $0x34] sm:$0xf] %v337
      %354 = vst [vmem:[%s145 + $0x38] sm:$0xf] %v338
      %355 = vst [vmem:[%s145 + $0x3c] sm:$0xf] %v339
      %s356 = smul.u32 16, %s13
      %p357 = scmp.lt.s32.totalorder %s356, 31
      %s358 = scalar_select %p357, %s356, 31
      %s359 = smul.addr %s358, 4
      %s360 = scalar_lea.vmem %s2, %s359
      // Predicated region
      $region29: #{gcn_forward_padded.4} parent=27 // pred_check
        %p361 = pneg %p78
      $region30: #{gcn_forward_padded.4} parent=27 // pred_check_branch
        %363 = sbr.rel (%p361) target = $region32
      $region31: #{gcn_forward_padded.4} parent=27 // pred_region
        %s364 = smul.u32 16, %s13
      $region32: #{gcn_forward_padded.4} parent=27 // pred_fallthru
        _
    $region28: #{gcn_forward_padded.4} parent=5 // pred_fallthru
      _
    %p365 = scmp.le.s32.totalorder 2, %s8
    // Predicated region
    $region33: #{gcn_forward_padded.4} parent=5 // pred_check
      %p366 = pneg %p365
    $region34: #{gcn_forward_padded.4} parent=5 // pred_check_branch
      %368 = sbr.rel (%p366) target = $region36
    $region35: #{gcn_forward_padded.4} parent=5 // pred_region
      %s369 = ssub.s32 %s8, 2
      // Predicated region
      $region37: #{gcn_forward_padded.4} parent=35 // pred_check
        %p370 = pneg %p84
      $region38: #{gcn_forward_padded.4} parent=35 // pred_check_branch
        %372 = sbr.rel (%p370) target = $region40
      $region39: #{gcn_forward_padded.4} parent=35 // pred_region
        %s373 = smul.u32 16, %s14
        %p374 = scmp.lt.s32.totalorder %s373, 31
        %s375 = scalar_select %p374, %s373, 31
        %s376 = smul.addr %s375, 4
        %s377 = scalar_lea.vmem %s2, %s376
      $region40: #{gcn_forward_padded.4} parent=35 // pred_fallthru
        _
    $region36: #{gcn_forward_padded.4} parent=5 // pred_fallthru
      _
  $region6: #{gcn_forward_padded.4} parent=0 // loop_footer
    %s12 = sadd.s32 1, %s8
  $region7: #{gcn_forward_padded.4} parent=0 // loop_footer_branch
    %7 = sbr.rel target = $region3
  $region8: #{gcn_forward_padded.4} parent=0 // loop_exit
    _

// kernel: gcn_forward_padded.5
$region0: #{gcn_forward_padded.5}
  #allocation0 [shape = 'u32[]', space=smem, size = 0x4, offset = 0x4, fixed_abs, tag = 'smem constant byte address 0x4 - core index']
  #allocation1 [shape = 'u32[72,128]{1,0:T(1,128)}', space=vmem, size = 0x9000, scoped, tag = 'internal scratch']
  %s0 = inlined_call_operand.vmem [shape: bf16[256,256], index: 0, kind: input, shape index: {}]
  %s1 = inlined_call_operand.vmem [shape: bf16[256,128], index: 1, kind: input, shape index: {}]
  %s2 = inlined_call_operand.vmem [shape: f32[1,128], index: 2, kind: input, shape index: {}]
  %s3 = inlined_call_operand.vmem [shape: bf16[256,128], index: 3, kind: output, shape index: {}]
  %s4 = sld [smem:[#allocation0]]
  $region45: #{gcn_forward_padded.5} parent=0
    _
  %s6 = ssub.s32 1, %s4
  %s7 = scalar_select 0, %s6, %s4
  loop: start=0, step=1, limit=4
  $region2: #{gcn_forward_padded.5} parent=0 // loop_pre_header
    _
  $region3: #{gcn_forward_padded.5} parent=0 // loop_header
    %s9 = sphi 0, %s13
    %p10 = scmp.ge.s32.totalorder %s9, 4
    %s19 = sphi 0, %s21
    %s22 = sphi 0, %s19
    %s23 = sphi 0, %s22
    %s39 = sphi 0, %s23
    %s43 = sphi 0, %s43
    %s45 = sphi 0, %s43
    %s46 = sphi 0, %s45
    %s60 = sphi 0, %s46
    %s64 = sphi 0, %s64
    %s66 = sphi 0, %s64
    %s67 = sphi 0, %s66
    %s81 = sphi 0, %s67
    %s87 = sphi 0, %s89
    %s90 = sphi 0, %s87
    %s91 = sphi 0, %s90
    %s107 = sphi 0, %s91
  $region4: #{gcn_forward_padded.5} parent=0 // loop_header_branch
    %12 = sbr.rel (%p10) target = $region8
  $region5: #{gcn_forward_padded.5} parent=0 // loop_body
    %s14 = ssub.s32 %s9, 1
    %s15 = ssub.s32 %s9, 2
    %s16 = sadd.s32 %s9, 1
    %s17 = ssub.s32 %s9, %s16
    %p18 = scmp.eq.s32.totalorder %s17, 0
    %s20 = sadd.s32 %s19, 1
    %s21 = scalar_select %p18, %s19, %s20
    %p24 = pneg %p18
    %p25 = scmp.eq.s32.totalorder %s9, 1
    %p26 = por %p24, %p25
    %p27 = scmp.ne.s32.totalorder %s19, %s22
    %p28 = scmp.eq.s32.totalorder %s9, 0
    %p29 = por %p27, %p28
    %p30 = scmp.ne.s32.totalorder %s19, %s22
    %p31 = scmp.eq.s32.totalorder %s14, 1
    %p32 = por %p30, %p31
    %p33 = scmp.ne.s32.totalorder %s22, %s23
    %p34 = scmp.eq.s32.totalorder %s14, 0
    %p35 = por %p33, %p34
    %p36 = scmp.ne.s32.totalorder %s22, %s23
    %p37 = scmp.eq.s32.totalorder %s15, 1
    %p38 = por %p36, %p37
    %p40 = scmp.ne.s32.totalorder %s23, %s39
    %p41 = scmp.eq.s32.totalorder %s15, 0
    %p42 = por %p40, %p41
    %s44 = sadd.s32 %s43, 1
    %p47 = scmp.eq.s32.totalorder %s9, 1
    %p48 = scmp.ne.s32.totalorder %s43, %s45
    %p49 = scmp.eq.s32.totalorder %s9, 0
    %p50 = por %p48, %p49
    %p51 = scmp.ne.s32.totalorder %s43, %s45
    %p52 = scmp.eq.s32.totalorder %s14, 1
    %p53 = por %p51, %p52
    %p54 = scmp.ne.s32.totalorder %s45, %s46
    %p55 = scmp.eq.s32.totalorder %s14, 0
    %p56 = por %p54, %p55
    %p57 = scmp.ne.s32.totalorder %s45, %s46
    %p58 = scmp.eq.s32.totalorder %s15, 1
    %p59 = por %p57, %p58
    %p61 = scmp.ne.s32.totalorder %s46, %s60
    %p62 = scmp.eq.s32.totalorder %s15, 0
    %p63 = por %p61, %p62
    %s65 = sadd.s32 %s64, 1
    %p68 = scmp.eq.s32.totalorder %s9, 1
    %p69 = scmp.ne.s32.totalorder %s64, %s66
    %p70 = scmp.eq.s32.totalorder %s9, 0
    %p71 = por %p69, %p70
    %p72 = scmp.ne.s32.totalorder %s64, %s66
    %p73 = scmp.eq.s32.totalorder %s14, 1
    %p74 = por %p72, %p73
    %p75 = scmp.ne.s32.totalorder %s66, %s67
    %p76 = scmp.eq.s32.totalorder %s14, 0
    %p77 = por %p75, %p76
    %p78 = scmp.ne.s32.totalorder %s66, %s67
    %p79 = scmp.eq.s32.totalorder %s15, 1
    %p80 = por %p78, %p79
    %p82 = scmp.ne.s32.totalorder %s67, %s81
    %p83 = scmp.eq.s32.totalorder %s15, 0
    %p84 = por %p82, %p83
    %s85 = ssub.s32 %s9, %s16
    %p86 = scmp.eq.s32.totalorder %s85, 0
    %s88 = sadd.s32 %s87, 1
    %s89 = scalar_select %p86, %s87, %s88
    %p92 = pneg %p86
    %p93 = scmp.eq.s32.totalorder %s9, 1
    %p94 = por %p92, %p93
    %p95 = scmp.ne.s32.totalorder %s87, %s90
    %p96 = scmp.eq.s32.totalorder %s9, 0
    %p97 = por %p95, %p96
    %p98 = scmp.ne.s32.totalorder %s87, %s90
    %p99 = scmp.eq.s32.totalorder %s14, 1
    %p100 = por %p98, %p99
    %p101 = scmp.ne.s32.totalorder %s90, %s91
    %p102 = scmp.eq.s32.totalorder %s14, 0
    %p103 = por %p101, %p102
    %p104 = scmp.ne.s32.totalorder %s90, %s91
    %p105 = scmp.eq.s32.totalorder %s15, 1
    %p106 = por %p104, %p105
    %p108 = scmp.ne.s32.totalorder %s91, %s107
    %p109 = scmp.eq.s32.totalorder %s15, 0
    %p110 = por %p108, %p109
    %p111 = scmp.le.s32.totalorder 1, %s9
    %p112 = scmp.lt.s32.totalorder %s9, 3
    %p113 = pnand %p111, %p112
    %p114 = pneg %p113
    // Predicated region
    $region9: #{gcn_forward_padded.5} parent=5 // pred_check
      _
    $region10: #{gcn_forward_padded.5} parent=5 // pred_check_branch
      %116 = sbr.rel (%p113) target = $region12
    $region11: #{gcn_forward_padded.5} parent=5 // pred_region
      %s117 = ssub.s32 %s9, 1
      // Predicated region
      $region13: #{gcn_forward_padded.5} parent=11 // pred_check
        %p118 = pneg %p56
      $region14: #{gcn_forward_padded.5} parent=11 // pred_check_branch
        %120 = sbr.rel (%p118) target = $region16
      $region15: #{gcn_forward_padded.5} parent=11 // pred_region
        _
      $region16: #{gcn_forward_padded.5} parent=11 // pred_fallthru
        _
      // Predicated region
      $region17: #{gcn_forward_padded.5} parent=11 // pred_check
        %p121 = pneg %p77
      $region18: #{gcn_forward_padded.5} parent=11 // pred_check_branch
        %123 = sbr.rel (%p121) target = $region20
      $region19: #{gcn_forward_padded.5} parent=11 // pred_region
        _
      $region20: #{gcn_forward_padded.5} parent=11 // pred_fallthru
        _
    $region12: #{gcn_forward_padded.5} parent=5 // pred_fallthru
      _
    %p124 = scmp.lt.s32.totalorder %s9, 2
    // Predicated region
    $region21: #{gcn_forward_padded.5} parent=5 // pred_check
      %p125 = pneg %p124
    $region22: #{gcn_forward_padded.5} parent=5 // pred_check_branch
      %127 = sbr.rel (%p125) target = $region24
    $region23: #{gcn_forward_padded.5} parent=5 // pred_region
      // Predicated region
      $region25: #{gcn_forward_padded.5} parent=23 // pred_check
        %p128 = pneg %p29
      $region26: #{gcn_forward_padded.5} parent=23 // pred_check_branch
        %130 = sbr.rel (%p128) target = $region28
      $region27: #{gcn_forward_padded.5} parent=23 // pred_region
        %s131 = smul.u32 16, %s9
        %p132 = scmp.lt.s32.totalorder %s131, 31
        %s133 = scalar_select %p132, %s131, 31
        %s134 = smul.addr %s133, 2
        %s135 = smul.addr %s134, 4
        %s136 = scalar_lea.vmem %s0, %s135
        %s137 = smul.u32 16, %s9
      $region28: #{gcn_forward_padded.5} parent=23 // pred_fallthru
        _
    $region24: #{gcn_forward_padded.5} parent=5 // pred_fallthru
      _
    %p138 = scmp.le.s32.totalorder 1, %s9
    %p139 = scmp.lt.s32.totalorder %s9, 3
    %p140 = pnand %p138, %p139
    %p141 = pneg %p140
    // Predicated region
    $region29: #{gcn_forward_padded.5} parent=5 // pred_check
      _
    $region30: #{gcn_forward_padded.5} parent=5 // pred_check_branch
      %143 = sbr.rel (%p140) target = $region32
    $region31: #{gcn_forward_padded.5} parent=5 // pred_region
      %s144 = ssub.s32 %s9, 1
      %s145 = smul.u32 16, %s14
      %p146 = scmp.lt.s32.totalorder %s145, 31
      %s147 = scalar_select %p146, %s145, 31
      %s148 = smul.addr %s147, 2
      %s149 = smul.addr %s148, 4
      %s150 = scalar_lea.vmem %s0, %s149
      %p151 = pneg %p35
      %p152 = pneg %p32
      %p153 = pneg %p56
      %p154 = pneg %p53
      %p155 = pneg %p77
      %p156 = pneg %p74
      %p157 = pneg %p103
      %p158 = pneg %p100
      %s159 = smul.u32 16, %s14
      %p160 = scmp.lt.s32.totalorder %s159, 31
      %s161 = scalar_select %p160, %s159, 31
      %s162 = smul.addr %s161, 4
      %s163 = scalar_lea.vmem %s3, %s162
      %s164 = smul.u32 16, %s14
      %p165 = scmp.lt.s32.totalorder %s164, 31
      %s166 = scalar_select %p165, %s164, 31
      %s167 = smul.addr %s166, 2
      %s168 = smul.addr %s167, 4
      %s169 = scalar_lea.vmem %s0, %s168
      %s170 = smul.u32 16, %s14
      %s171 = smul.u32 16, %s14
      %p172 = scmp.lt.s32.totalorder %s171, 31
      %s173 = scalar_select %p172, %s171, 31
      %s174 = smul.addr %s173, 4
      %s175 = scalar_lea.vmem %s3, %s174
      %s176 = smul.u32 16, %s14
      %v177 = vld [vmem:[%s169] sm:$0xff]
      %v178 = vld [vmem:[%s169 + $0x8] sm:$0xff]
      %v179 = vld [vmem:[%s169 + $0x10] sm:$0xff]
      %v180 = vld [vmem:[%s169 + $0x18] sm:$0xff]
      %v181 = vld [vmem:[%s169 + $0x20] sm:$0xff]
      %v182 = vld [vmem:[%s169 + $0x28] sm:$0xff]
      %v183 = vld [vmem:[%s169 + $0x30] sm:$0xff]
      %v184 = vld [vmem:[%s169 + $0x38] sm:$0xff]
      %v185 = vld [vmem:[%s169 + $0x40] sm:$0xff]
      %v186 = vld [vmem:[%s169 + $0x48] sm:$0xff]
      %v187 = vld [vmem:[%s169 + $0x50] sm:$0xff]
      %v188 = vld [vmem:[%s169 + $0x58] sm:$0xff]
      %v189 = vld [vmem:[%s169 + $0x60] sm:$0xff]
      %v190 = vld [vmem:[%s169 + $0x68] sm:$0xff]
      %v191 = vld [vmem:[%s169 + $0x70] sm:$0xff]
      %v192 = vld [vmem:[%s169 + $0x78] sm:$0xff]
      %v193 = vld [vmem:[%s1] sm:$0xf]
      %v194 = vld [vmem:[%s1 + $0x4] sm:$0xf]
      %v195 = vld [vmem:[%s1 + $0x8] sm:$0xf]
      %v196 = vld [vmem:[%s1 + $0xc] sm:$0xf]
      %v197 = vld [vmem:[%s1 + $0x10] sm:$0xf]
      %v198 = vld [vmem:[%s1 + $0x14] sm:$0xf]
      %v199 = vld [vmem:[%s1 + $0x18] sm:$0xf]
      %v200 = vld [vmem:[%s1 + $0x1c] sm:$0xf]
      %v201 = vld [vmem:[%s1 + $0x20] sm:$0xf]
      %v202 = vld [vmem:[%s1 + $0x24] sm:$0xf]
      %v203 = vld [vmem:[%s1 + $0x28] sm:$0xf]
      %v204 = vld [vmem:[%s1 + $0x2c] sm:$0xf]
      %v205 = vld [vmem:[%s1 + $0x30] sm:$0xf]
      %v206 = vld [vmem:[%s1 + $0x34] sm:$0xf]
      %v207 = vld [vmem:[%s1 + $0x38] sm:$0xf]
      %v208 = vld [vmem:[%s1 + $0x3c] sm:$0xf]
      %v209 = vld [vmem:[%s1 + $0x40] sm:$0xf]
      %v210 = vld [vmem:[%s1 + $0x44] sm:$0xf]
      %v211 = vld [vmem:[%s1 + $0x48] sm:$0xf]
      %v212 = vld [vmem:[%s1 + $0x4c] sm:$0xf]
      %v213 = vld [vmem:[%s1 + $0x50] sm:$0xf]
      %v214 = vld [vmem:[%s1 + $0x54] sm:$0xf]
      %v215 = vld [vmem:[%s1 + $0x58] sm:$0xf]
      %v216 = vld [vmem:[%s1 + $0x5c] sm:$0xf]
      %v217 = vld [vmem:[%s1 + $0x60] sm:$0xf]
      %v218 = vld [vmem:[%s1 + $0x64] sm:$0xf]
      %v219 = vld [vmem:[%s1 + $0x68] sm:$0xf]
      %v220 = vld [vmem:[%s1 + $0x6c] sm:$0xf]
      %v221 = vld [vmem:[%s1 + $0x70] sm:$0xf]
      %v222 = vld [vmem:[%s1 + $0x74] sm:$0xf]
      %v223 = vld [vmem:[%s1 + $0x78] sm:$0xf]
      %v224 = vld [vmem:[%s1 + $0x7c] sm:$0xf]
      %v225 = vld [vmem:[%s2] sm:$0x1]
      %v227 = vperm.slane %v225, 0
      %v245 = vunpack.c.l.b16 %v177
      %v246 = vunpack.c.h.b16 %v177
      %v247 = vunpack.c.l.b16 %v178
      %v248 = vunpack.c.h.b16 %v178
      %v249 = vunpack.c.l.b16 %v179
      %v250 = vunpack.c.h.b16 %v179
      %v251 = vunpack.c.l.b16 %v180
      %v252 = vunpack.c.h.b16 %v180
      %v253 = vunpack.c.l.b16 %v181
      %v254 = vunpack.c.h.b16 %v181
      %v255 = vunpack.c.l.b16 %v182
      %v256 = vunpack.c.h.b16 %v182
      %v257 = vunpack.c.l.b16 %v183
      %v258 = vunpack.c.h.b16 %v183
      %v259 = vunpack.c.l.b16 %v184
      %v260 = vunpack.c.h.b16 %v184
      %v261 = vunpack.c.l.b16 %v185
      %v262 = vunpack.c.h.b16 %v185
      %v263 = vunpack.c.l.b16 %v186
      %v264 = vunpack.c.h.b16 %v186
      %v265 = vunpack.c.l.b16 %v187
      %v266 = vunpack.c.h.b16 %v187
      %v267 = vunpack.c.l.b16 %v188
      %v268 = vunpack.c.h.b16 %v188
      %v269 = vunpack.c.l.b16 %v189
      %v270 = vunpack.c.h.b16 %v189
      %v271 = vunpack.c.l.b16 %v190
      %v272 = vunpack.c.h.b16 %v190
      %v273 = vunpack.c.l.b16 %v191
      %v274 = vunpack.c.h.b16 %v191
      %v275 = vunpack.c.l.b16 %v192
      %v276 = vunpack.c.h.b16 %v192
      %v277 = vpack.c.b16 %v247, %v245
      %v278 = vpack.c.b16 %v248, %v246
      %v279 = vpack.c.b16 %v251, %v249
      %v280 = vpack.c.b16 %v252, %v250
      %v281 = vpack.c.b16 %v255, %v253
      %v282 = vpack.c.b16 %v256, %v254
      %v283 = vpack.c.b16 %v259, %v257
      %v284 = vpack.c.b16 %v260, %v258
      %v285 = vpack.c.b16 %v263, %v261
      %v286 = vpack.c.b16 %v264, %v262
      %v287 = vpack.c.b16 %v267, %v265
      %v288 = vpack.c.b16 %v268, %v266
      %v289 = vpack.c.b16 %v271, %v269
      %v290 = vpack.c.b16 %v272, %v270
      %v291 = vpack.c.b16 %v275, %v273
      %v292 = vpack.c.b16 %v276, %v274
      %v341 = vunpack.c.l.b16 %v193
      %v342 = vunpack.c.l.b16 %v194
      %v343 = vunpack.c.l.b16 %v195
      %v344 = vunpack.c.l.b16 %v196
      %v345 = vunpack.c.l.b16 %v197
      %v346 = vunpack.c.l.b16 %v198
      %v347 = vunpack.c.l.b16 %v199
      %v348 = vunpack.c.l.b16 %v200
      %v349 = vunpack.c.l.b16 %v201
      %v350 = vunpack.c.l.b16 %v202
      %v351 = vunpack.c.l.b16 %v203
      %v352 = vunpack.c.l.b16 %v204
      %v353 = vunpack.c.l.b16 %v205
      %v354 = vunpack.c.l.b16 %v206
      %v355 = vunpack.c.l.b16 %v207
      %v356 = vunpack.c.l.b16 %v208
      %v357 = vunpack.c.l.b16 %v209
      %v358 = vunpack.c.l.b16 %v210
      %v359 = vunpack.c.l.b16 %v211
      %v360 = vunpack.c.l.b16 %v212
      %v361 = vunpack.c.l.b16 %v213
      %v362 = vunpack.c.l.b16 %v214
      %v363 = vunpack.c.l.b16 %v215
      %v364 = vunpack.c.l.b16 %v216
      %v365 = vunpack.c.l.b16 %v217
      %v366 = vunpack.c.l.b16 %v218
      %v367 = vunpack.c.l.b16 %v219
      %v368 = vunpack.c.l.b16 %v220
      %v369 = vunpack.c.l.b16 %v221
      %v370 = vunpack.c.l.b16 %v222
      %v371 = vunpack.c.l.b16 %v223
      %v372 = vunpack.c.l.b16 %v224
      %v373 = vpack.c.b16 %v342, %v341
      %v374 = vpack.c.b16 %v344, %v343
      %v375 = vpack.c.b16 %v346, %v345
      %v376 = vpack.c.b16 %v348, %v347
      %v377 = vpack.c.b16 %v350, %v349
      %v378 = vpack.c.b16 %v352, %v351
      %v379 = vpack.c.b16 %v354, %v353
      %v380 = vpack.c.b16 %v356, %v355
      %v381 = vpack.c.b16 %v358, %v357
      %v382 = vpack.c.b16 %v360, %v359
      %v383 = vpack.c.b16 %v362, %v361
      %v384 = vpack.c.b16 %v364, %v363
      %v385 = vpack.c.b16 %v366, %v365
      %v386 = vpack.c.b16 %v368, %v367
      %v387 = vpack.c.b16 %v370, %v369
      %v388 = vpack.c.b16 %v372, %v371
      %405 = vmatpush.bf16.msra.mxu0 %v380
      %406 = vmatpush.bf16.msra.mxu0 %v379
      %407 = vmatpush.bf16.msra.mxu0 %v378
      %408 = vmatpush.bf16.msra.mxu0 %v377
      %409 = vmatpush.bf16.msra.mxu0 %v376
      %410 = vmatpush.bf16.msra.mxu0 %v375
      %411 = vmatpush.bf16.msra.mxu0 %v374
      %412 = vmatpush.bf16.msra.mxu0 %v373
      %413 = vmatmul.bf16.gmra.mxu0 %v277
      %v414 = vpop.f32.mrf.mxu0
      %v415 = vadd.f32 %v227, %v414
      %v416 = vpop.f32.mrf.mxu0
      %v417 = vadd.f32 %v227, %v416
      %418 = vmatmul.bf16.gmra.mxu0 %v279
      %v419 = vpop.f32.mrf.mxu0
      %v420 = vadd.f32 %v227, %v419
      %v421 = vpop.f32.mrf.mxu0
      %v422 = vadd.f32 %v227, %v421
      %423 = vmatmul.bf16.gmra.mxu0 %v281
      %v424 = vpop.f32.mrf.mxu0
      %v425 = vadd.f32 %v227, %v424
      %v426 = vpop.f32.mrf.mxu0
      %v427 = vadd.f32 %v227, %v426
      %428 = vmatmul.bf16.gmra.mxu0 %v283
      %v429 = vpop.f32.mrf.mxu0
      %v430 = vadd.f32 %v227, %v429
      %v431 = vpop.f32.mrf.mxu0
      %v432 = vadd.f32 %v227, %v431
      %433 = vmatmul.bf16.gmra.mxu0 %v285
      %v434 = vpop.f32.mrf.mxu0
      %v435 = vadd.f32 %v227, %v434
      %v436 = vpop.f32.mrf.mxu0
      %v437 = vadd.f32 %v227, %v436
      %438 = vmatmul.bf16.gmra.mxu0 %v287
      %v439 = vpop.f32.mrf.mxu0
      %v440 = vadd.f32 %v227, %v439
      %v441 = vpop.f32.mrf.mxu0
      %v442 = vadd.f32 %v227, %v441
      %443 = vmatmul.bf16.gmra.mxu0 %v289
      %v444 = vpop.f32.mrf.mxu0
      %v445 = vadd.f32 %v227, %v444
      %v446 = vpop.f32.mrf.mxu0
      %v447 = vadd.f32 %v227, %v446
      %448 = vmatmul.bf16.gmra.mxu0 %v291
      %v449 = vpop.f32.mrf.mxu0
      %v450 = vadd.f32 %v227, %v449
      %v451 = vpop.f32.mrf.mxu0
      %v452 = vadd.f32 %v227, %v451
      %453 = vdwg.mxu0
      %454 = vmatpush.bf16.msra.mxu0 %v388
      %455 = vmatpush.bf16.msra.mxu0 %v387
      %456 = vmatpush.bf16.msra.mxu0 %v386
      %457 = vmatpush.bf16.msra.mxu0 %v385
      %458 = vmatpush.bf16.msra.mxu0 %v384
      %459 = vmatpush.bf16.msra.mxu0 %v383
      %460 = vmatpush.bf16.msra.mxu0 %v382
      %461 = vmatpush.bf16.msra.mxu0 %v381
      %462 = vmatmul.bf16.gmra.mxu0 %v278
      %v463 = vpop.f32.mrf.mxu0
      %v464 = vadd.f32 %v415, %v463
      %v465 = vpop.f32.mrf.mxu0
      %v466 = vadd.f32 %v417, %v465
      %467 = vmatmul.bf16.gmra.mxu0 %v280
      %v468 = vpop.f32.mrf.mxu0
      %v469 = vadd.f32 %v420, %v468
      %v470 = vpop.f32.mrf.mxu0
      %v471 = vadd.f32 %v422, %v470
      %472 = vmatmul.bf16.gmra.mxu0 %v282
      %v473 = vpop.f32.mrf.mxu0
      %v474 = vadd.f32 %v425, %v473
      %v475 = vpop.f32.mrf.mxu0
      %v476 = vadd.f32 %v427, %v475
      %477 = vmatmul.bf16.gmra.mxu0 %v284
      %v478 = vpop.f32.mrf.mxu0
      %v479 = vadd.f32 %v430, %v478
      %v480 = vpop.f32.mrf.mxu0
      %v481 = vadd.f32 %v432, %v480
      %482 = vmatmul.bf16.gmra.mxu0 %v286
      %v483 = vpop.f32.mrf.mxu0
      %v484 = vadd.f32 %v435, %v483
      %v485 = vpop.f32.mrf.mxu0
      %v486 = vadd.f32 %v437, %v485
      %487 = vmatmul.bf16.gmra.mxu0 %v288
      %v488 = vpop.f32.mrf.mxu0
      %v489 = vadd.f32 %v440, %v488
      %v490 = vpop.f32.mrf.mxu0
      %v491 = vadd.f32 %v442, %v490
      %492 = vmatmul.bf16.gmra.mxu0 %v290
      %v493 = vpop.f32.mrf.mxu0
      %v494 = vadd.f32 %v445, %v493
      %v495 = vpop.f32.mrf.mxu0
      %v496 = vadd.f32 %v447, %v495
      %497 = vmatmul.bf16.gmra.mxu0 %v292
      %v498 = vpop.f32.mrf.mxu0
      %v499 = vadd.f32 %v450, %v498
      %v500 = vpop.f32.mrf.mxu0
      %v501 = vadd.f32 %v452, %v500
      %502 = vdwg.mxu0
      %v503 = vmax.f32 %v464, 0.0
      %v504 = vmax.f32 %v466, 0.0
      %v505 = vmax.f32 %v469, 0.0
      %v506 = vmax.f32 %v471, 0.0
      %v507 = vmax.f32 %v474, 0.0
      %v508 = vmax.f32 %v476, 0.0
      %v509 = vmax.f32 %v479, 0.0
      %v510 = vmax.f32 %v481, 0.0
      %v511 = vmax.f32 %v484, 0.0
      %v512 = vmax.f32 %v486, 0.0
      %v513 = vmax.f32 %v489, 0.0
      %v514 = vmax.f32 %v491, 0.0
      %v515 = vmax.f32 %v494, 0.0
      %v516 = vmax.f32 %v496, 0.0
      %v517 = vmax.f32 %v499, 0.0
      %v518 = vmax.f32 %v501, 0.0
      %v519 = vpack.c.bf16 %v503, %v503
      %v520 = vpack.c.bf16 %v504, %v504
      %v521 = vpack.c.bf16 %v505, %v505
      %v522 = vpack.c.bf16 %v506, %v506
      %v523 = vpack.c.bf16 %v507, %v507
      %v524 = vpack.c.bf16 %v508, %v508
      %v525 = vpack.c.bf16 %v509, %v509
      %v526 = vpack.c.bf16 %v510, %v510
      %v527 = vpack.c.bf16 %v511, %v511
      %v528 = vpack.c.bf16 %v512, %v512
      %v529 = vpack.c.bf16 %v513, %v513
      %v530 = vpack.c.bf16 %v514, %v514
      %v531 = vpack.c.bf16 %v515, %v515
      %v532 = vpack.c.bf16 %v516, %v516
      %v533 = vpack.c.bf16 %v517, %v517
      %v534 = vpack.c.bf16 %v518, %v518
      %535 = vst [vmem:[%s175] sm:$0xf] %v519
      %536 = vst [vmem:[%s175 + $0x4] sm:$0xf] %v520
      %537 = vst [vmem:[%s175 + $0x8] sm:$0xf] %v521
      %538 = vst [vmem:[%s175 + $0xc] sm:$0xf] %v522
      %539 = vst [vmem:[%s175 + $0x10] sm:$0xf] %v523
      %540 = vst [vmem:[%s175 + $0x14] sm:$0xf] %v524
      %541 = vst [vmem:[%s175 + $0x18] sm:$0xf] %v525
      %542 = vst [vmem:[%s175 + $0x1c] sm:$0xf] %v526
      %543 = vst [vmem:[%s175 + $0x20] sm:$0xf] %v527
      %544 = vst [vmem:[%s175 + $0x24] sm:$0xf] %v528
      %545 = vst [vmem:[%s175 + $0x28] sm:$0xf] %v529
      %546 = vst [vmem:[%s175 + $0x2c] sm:$0xf] %v530
      %547 = vst [vmem:[%s175 + $0x30] sm:$0xf] %v531
      %548 = vst [vmem:[%s175 + $0x34] sm:$0xf] %v532
      %549 = vst [vmem:[%s175 + $0x38] sm:$0xf] %v533
      %550 = vst [vmem:[%s175 + $0x3c] sm:$0xf] %v534
      %s551 = smul.u32 16, %s14
      %p552 = scmp.lt.s32.totalorder %s551, 31
      %s553 = scalar_select %p552, %s551, 31
      %s554 = smul.addr %s553, 4
      %s555 = scalar_lea.vmem %s3, %s554
      // Predicated region
      $region33: #{gcn_forward_padded.5} parent=31 // pred_check
        %p556 = pneg %p100
      $region34: #{gcn_forward_padded.5} parent=31 // pred_check_branch
        %558 = sbr.rel (%p556) target = $region36
      $region35: #{gcn_forward_padded.5} parent=31 // pred_region
        %s559 = smul.u32 16, %s14
      $region36: #{gcn_forward_padded.5} parent=31 // pred_fallthru
        _
    $region32: #{gcn_forward_padded.5} parent=5 // pred_fallthru
      _
    %p560 = scmp.le.s32.totalorder 2, %s9
    // Predicated region
    $region37: #{gcn_forward_padded.5} parent=5 // pred_check
      %p561 = pneg %p560
    $region38: #{gcn_forward_padded.5} parent=5 // pred_check_branch
      %563 = sbr.rel (%p561) target = $region40
    $region39: #{gcn_forward_padded.5} parent=5 // pred_region
      %s564 = ssub.s32 %s9, 2
      // Predicated region
      $region41: #{gcn_forward_padded.5} parent=39 // pred_check
        %p565 = pneg %p106
      $region42: #{gcn_forward_padded.5} parent=39 // pred_check_branch
        %567 = sbr.rel (%p565) target = $region44
      $region43: #{gcn_forward_padded.5} parent=39 // pred_region
        %s568 = smul.u32 16, %s15
        %p569 = scmp.lt.s32.totalorder %s568, 31
        %s570 = scalar_select %p569, %s568, 31
        %s571 = smul.addr %s570, 4
        %s572 = scalar_lea.vmem %s3, %s571
      $region44: #{gcn_forward_padded.5} parent=39 // pred_fallthru
        _
    $region40: #{gcn_forward_padded.5} parent=5 // pred_fallthru
      _
  $region6: #{gcn_forward_padded.5} parent=0 // loop_footer
    %s13 = sadd.s32 1, %s9
  $region7: #{gcn_forward_padded.5} parent=0 // loop_footer_branch
    %8 = sbr.rel target = $region3
  $region8: #{gcn_forward_padded.5} parent=0 // loop_exit
    _

// kernel: gcn_forward_padded.7
$region0: #{gcn_forward_padded.7}
  #allocation0 [shape = 'u32[]', space=smem, size = 0x4, offset = 0x4, fixed_abs, tag = 'smem constant byte address 0x4 - core index']
  #allocation1 [shape = 'u32[72,128]{1,0:T(1,128)}', space=vmem, size = 0x9000, scoped, tag = 'internal scratch']
  %s0 = inlined_call_operand.vmem [shape: bf16[256,256], index: 0, kind: input, shape index: {}]
  %s1 = inlined_call_operand.vmem [shape: bf16[256,128], index: 1, kind: input, shape index: {}]
  %s2 = inlined_call_operand.vmem [shape: f32[1,128], index: 2, kind: input, shape index: {}]
  %s3 = inlined_call_operand.vmem [shape: f32[256,128], index: 3, kind: output, shape index: {}]
  %s4 = sld [smem:[#allocation0]]
  $region45: #{gcn_forward_padded.7} parent=0
    _
  %s6 = ssub.s32 1, %s4
  %s7 = scalar_select 0, %s6, %s4
  loop: start=0, step=1, limit=4
  $region2: #{gcn_forward_padded.7} parent=0 // loop_pre_header
    _
  $region3: #{gcn_forward_padded.7} parent=0 // loop_header
    %s9 = sphi 0, %s13
    %p10 = scmp.ge.s32.totalorder %s9, 4
    %s19 = sphi 0, %s21
    %s22 = sphi 0, %s19
    %s23 = sphi 0, %s22
    %s39 = sphi 0, %s23
    %s43 = sphi 0, %s43
    %s45 = sphi 0, %s43
    %s46 = sphi 0, %s45
    %s60 = sphi 0, %s46
    %s64 = sphi 0, %s64
    %s66 = sphi 0, %s64
    %s67 = sphi 0, %s66
    %s81 = sphi 0, %s67
    %s87 = sphi 0, %s89
    %s90 = sphi 0, %s87
    %s91 = sphi 0, %s90
    %s107 = sphi 0, %s91
  $region4: #{gcn_forward_padded.7} parent=0 // loop_header_branch
    %12 = sbr.rel (%p10) target = $region8
  $region5: #{gcn_forward_padded.7} parent=0 // loop_body
    %s14 = ssub.s32 %s9, 1
    %s15 = ssub.s32 %s9, 2
    %s16 = sadd.s32 %s9, 1
    %s17 = ssub.s32 %s9, %s16
    %p18 = scmp.eq.s32.totalorder %s17, 0
    %s20 = sadd.s32 %s19, 1
    %s21 = scalar_select %p18, %s19, %s20
    %p24 = pneg %p18
    %p25 = scmp.eq.s32.totalorder %s9, 1
    %p26 = por %p24, %p25
    %p27 = scmp.ne.s32.totalorder %s19, %s22
    %p28 = scmp.eq.s32.totalorder %s9, 0
    %p29 = por %p27, %p28
    %p30 = scmp.ne.s32.totalorder %s19, %s22
    %p31 = scmp.eq.s32.totalorder %s14, 1
    %p32 = por %p30, %p31
    %p33 = scmp.ne.s32.totalorder %s22, %s23
    %p34 = scmp.eq.s32.totalorder %s14, 0
    %p35 = por %p33, %p34
    %p36 = scmp.ne.s32.totalorder %s22, %s23
    %p37 = scmp.eq.s32.totalorder %s15, 1
    %p38 = por %p36, %p37
    %p40 = scmp.ne.s32.totalorder %s23, %s39
    %p41 = scmp.eq.s32.totalorder %s15, 0
    %p42 = por %p40, %p41
    %s44 = sadd.s32 %s43, 1
    %p47 = scmp.eq.s32.totalorder %s9, 1
    %p48 = scmp.ne.s32.totalorder %s43, %s45
    %p49 = scmp.eq.s32.totalorder %s9, 0
    %p50 = por %p48, %p49
    %p51 = scmp.ne.s32.totalorder %s43, %s45
    %p52 = scmp.eq.s32.totalorder %s14, 1
    %p53 = por %p51, %p52
    %p54 = scmp.ne.s32.totalorder %s45, %s46
    %p55 = scmp.eq.s32.totalorder %s14, 0
    %p56 = por %p54, %p55
    %p57 = scmp.ne.s32.totalorder %s45, %s46
    %p58 = scmp.eq.s32.totalorder %s15, 1
    %p59 = por %p57, %p58
    %p61 = scmp.ne.s32.totalorder %s46, %s60
    %p62 = scmp.eq.s32.totalorder %s15, 0
    %p63 = por %p61, %p62
    %s65 = sadd.s32 %s64, 1
    %p68 = scmp.eq.s32.totalorder %s9, 1
    %p69 = scmp.ne.s32.totalorder %s64, %s66
    %p70 = scmp.eq.s32.totalorder %s9, 0
    %p71 = por %p69, %p70
    %p72 = scmp.ne.s32.totalorder %s64, %s66
    %p73 = scmp.eq.s32.totalorder %s14, 1
    %p74 = por %p72, %p73
    %p75 = scmp.ne.s32.totalorder %s66, %s67
    %p76 = scmp.eq.s32.totalorder %s14, 0
    %p77 = por %p75, %p76
    %p78 = scmp.ne.s32.totalorder %s66, %s67
    %p79 = scmp.eq.s32.totalorder %s15, 1
    %p80 = por %p78, %p79
    %p82 = scmp.ne.s32.totalorder %s67, %s81
    %p83 = scmp.eq.s32.totalorder %s15, 0
    %p84 = por %p82, %p83
    %s85 = ssub.s32 %s9, %s16
    %p86 = scmp.eq.s32.totalorder %s85, 0
    %s88 = sadd.s32 %s87, 1
    %s89 = scalar_select %p86, %s87, %s88
    %p92 = pneg %p86
    %p93 = scmp.eq.s32.totalorder %s9, 1
    %p94 = por %p92, %p93
    %p95 = scmp.ne.s32.totalorder %s87, %s90
    %p96 = scmp.eq.s32.totalorder %s9, 0
    %p97 = por %p95, %p96
    %p98 = scmp.ne.s32.totalorder %s87, %s90
    %p99 = scmp.eq.s32.totalorder %s14, 1
    %p100 = por %p98, %p99
    %p101 = scmp.ne.s32.totalorder %s90, %s91
    %p102 = scmp.eq.s32.totalorder %s14, 0
    %p103 = por %p101, %p102
    %p104 = scmp.ne.s32.totalorder %s90, %s91
    %p105 = scmp.eq.s32.totalorder %s15, 1
    %p106 = por %p104, %p105
    %p108 = scmp.ne.s32.totalorder %s91, %s107
    %p109 = scmp.eq.s32.totalorder %s15, 0
    %p110 = por %p108, %p109
    %p111 = scmp.le.s32.totalorder 1, %s9
    %p112 = scmp.lt.s32.totalorder %s9, 3
    %p113 = pnand %p111, %p112
    %p114 = pneg %p113
    // Predicated region
    $region9: #{gcn_forward_padded.7} parent=5 // pred_check
      _
    $region10: #{gcn_forward_padded.7} parent=5 // pred_check_branch
      %116 = sbr.rel (%p113) target = $region12
    $region11: #{gcn_forward_padded.7} parent=5 // pred_region
      %s117 = ssub.s32 %s9, 1
      // Predicated region
      $region13: #{gcn_forward_padded.7} parent=11 // pred_check
        %p118 = pneg %p56
      $region14: #{gcn_forward_padded.7} parent=11 // pred_check_branch
        %120 = sbr.rel (%p118) target = $region16
      $region15: #{gcn_forward_padded.7} parent=11 // pred_region
        _
      $region16: #{gcn_forward_padded.7} parent=11 // pred_fallthru
        _
      // Predicated region
      $region17: #{gcn_forward_padded.7} parent=11 // pred_check
        %p121 = pneg %p77
      $region18: #{gcn_forward_padded.7} parent=11 // pred_check_branch
        %123 = sbr.rel (%p121) target = $region20
      $region19: #{gcn_forward_padded.7} parent=11 // pred_region
        _
      $region20: #{gcn_forward_padded.7} parent=11 // pred_fallthru
        _
    $region12: #{gcn_forward_padded.7} parent=5 // pred_fallthru
      _
    %p124 = scmp.lt.s32.totalorder %s9, 2
    // Predicated region
    $region21: #{gcn_forward_padded.7} parent=5 // pred_check
      %p125 = pneg %p124
    $region22: #{gcn_forward_padded.7} parent=5 // pred_check_branch
      %127 = sbr.rel (%p125) target = $region24
    $region23: #{gcn_forward_padded.7} parent=5 // pred_region
      // Predicated region
      $region25: #{gcn_forward_padded.7} parent=23 // pred_check
        %p128 = pneg %p29
      $region26: #{gcn_forward_padded.7} parent=23 // pred_check_branch
        %130 = sbr.rel (%p128) target = $region28
      $region27: #{gcn_forward_padded.7} parent=23 // pred_region
        %s131 = smul.u32 16, %s9
        %p132 = scmp.lt.s32.totalorder %s131, 31
        %s133 = scalar_select %p132, %s131, 31
        %s134 = smul.addr %s133, 2
        %s135 = smul.addr %s134, 4
        %s136 = scalar_lea.vmem %s0, %s135
        %s137 = smul.u32 16, %s9
      $region28: #{gcn_forward_padded.7} parent=23 // pred_fallthru
        _
    $region24: #{gcn_forward_padded.7} parent=5 // pred_fallthru
      _
    %p138 = scmp.le.s32.totalorder 1, %s9
    %p139 = scmp.lt.s32.totalorder %s9, 3
    %p140 = pnand %p138, %p139
    %p141 = pneg %p140
    // Predicated region
    $region29: #{gcn_forward_padded.7} parent=5 // pred_check
      _
    $region30: #{gcn_forward_padded.7} parent=5 // pred_check_branch
      %143 = sbr.rel (%p140) target = $region32
    $region31: #{gcn_forward_padded.7} parent=5 // pred_region
      %s144 = ssub.s32 %s9, 1
      %s145 = smul.u32 16, %s14
      %p146 = scmp.lt.s32.totalorder %s145, 31
      %s147 = scalar_select %p146, %s145, 31
      %s148 = smul.addr %s147, 2
      %s149 = smul.addr %s148, 4
      %s150 = scalar_lea.vmem %s0, %s149
      %p151 = pneg %p35
      %p152 = pneg %p32
      %p153 = pneg %p56
      %p154 = pneg %p53
      %p155 = pneg %p77
      %p156 = pneg %p74
      %p157 = pneg %p103
      %p158 = pneg %p100
      %s159 = smul.u32 16, %s14
      %p160 = scmp.lt.s32.totalorder %s159, 31
      %s161 = scalar_select %p160, %s159, 31
      %s162 = smul.addr %s161, 8
      %s163 = scalar_lea.vmem %s3, %s162
      %s164 = smul.u32 16, %s14
      %p165 = scmp.lt.s32.totalorder %s164, 31
      %s166 = scalar_select %p165, %s164, 31
      %s167 = smul.addr %s166, 2
      %s168 = smul.addr %s167, 4
      %s169 = scalar_lea.vmem %s0, %s168
      %s170 = smul.u32 16, %s14
      %s171 = smul.u32 16, %s14
      %p172 = scmp.lt.s32.totalorder %s171, 31
      %s173 = scalar_select %p172, %s171, 31
      %s174 = smul.addr %s173, 8
      %s175 = scalar_lea.vmem %s3, %s174
      %s176 = smul.u32 16, %s14
      %v177 = vld [vmem:[%s169] sm:$0xff]
      %v178 = vld [vmem:[%s169 + $0x8] sm:$0xff]
      %v179 = vld [vmem:[%s169 + $0x10] sm:$0xff]
      %v180 = vld [vmem:[%s169 + $0x18] sm:$0xff]
      %v181 = vld [vmem:[%s169 + $0x20] sm:$0xff]
      %v182 = vld [vmem:[%s169 + $0x28] sm:$0xff]
      %v183 = vld [vmem:[%s169 + $0x30] sm:$0xff]
      %v184 = vld [vmem:[%s169 + $0x38] sm:$0xff]
      %v185 = vld [vmem:[%s169 + $0x40] sm:$0xff]
      %v186 = vld [vmem:[%s169 + $0x48] sm:$0xff]
      %v187 = vld [vmem:[%s169 + $0x50] sm:$0xff]
      %v188 = vld [vmem:[%s169 + $0x58] sm:$0xff]
      %v189 = vld [vmem:[%s169 + $0x60] sm:$0xff]
      %v190 = vld [vmem:[%s169 + $0x68] sm:$0xff]
      %v191 = vld [vmem:[%s169 + $0x70] sm:$0xff]
      %v192 = vld [vmem:[%s169 + $0x78] sm:$0xff]
      %v193 = vld [vmem:[%s1] sm:$0xf]
      %v194 = vld [vmem:[%s1 + $0x4] sm:$0xf]
      %v195 = vld [vmem:[%s1 + $0x8] sm:$0xf]
      %v196 = vld [vmem:[%s1 + $0xc] sm:$0xf]
      %v197 = vld [vmem:[%s1 + $0x10] sm:$0xf]
      %v198 = vld [vmem:[%s1 + $0x14] sm:$0xf]
      %v199 = vld [vmem:[%s1 + $0x18] sm:$0xf]
      %v200 = vld [vmem:[%s1 + $0x1c] sm:$0xf]
      %v201 = vld [vmem:[%s1 + $0x20] sm:$0xf]
      %v202 = vld [vmem:[%s1 + $0x24] sm:$0xf]
      %v203 = vld [vmem:[%s1 + $0x28] sm:$0xf]
      %v204 = vld [vmem:[%s1 + $0x2c] sm:$0xf]
      %v205 = vld [vmem:[%s1 + $0x30] sm:$0xf]
      %v206 = vld [vmem:[%s1 + $0x34] sm:$0xf]
      %v207 = vld [vmem:[%s1 + $0x38] sm:$0xf]
      %v208 = vld [vmem:[%s1 + $0x3c] sm:$0xf]
      %v209 = vld [vmem:[%s1 + $0x40] sm:$0xf]
      %v210 = vld [vmem:[%s1 + $0x44] sm:$0xf]
      %v211 = vld [vmem:[%s1 + $0x48] sm:$0xf]
      %v212 = vld [vmem:[%s1 + $0x4c] sm:$0xf]
      %v213 = vld [vmem:[%s1 + $0x50] sm:$0xf]
      %v214 = vld [vmem:[%s1 + $0x54] sm:$0xf]
      %v215 = vld [vmem:[%s1 + $0x58] sm:$0xf]
      %v216 = vld [vmem:[%s1 + $0x5c] sm:$0xf]
      %v217 = vld [vmem:[%s1 + $0x60] sm:$0xf]
      %v218 = vld [vmem:[%s1 + $0x64] sm:$0xf]
      %v219 = vld [vmem:[%s1 + $0x68] sm:$0xf]
      %v220 = vld [vmem:[%s1 + $0x6c] sm:$0xf]
      %v221 = vld [vmem:[%s1 + $0x70] sm:$0xf]
      %v222 = vld [vmem:[%s1 + $0x74] sm:$0xf]
      %v223 = vld [vmem:[%s1 + $0x78] sm:$0xf]
      %v224 = vld [vmem:[%s1 + $0x7c] sm:$0xf]
      %v225 = vld [vmem:[%s2] sm:$0x1]
      %v227 = vperm.slane %v225, 0
      %v245 = vunpack.c.l.b16 %v177
      %v246 = vunpack.c.h.b16 %v177
      %v247 = vunpack.c.l.b16 %v178
      %v248 = vunpack.c.h.b16 %v178
      %v249 = vunpack.c.l.b16 %v179
      %v250 = vunpack.c.h.b16 %v179
      %v251 = vunpack.c.l.b16 %v180
      %v252 = vunpack.c.h.b16 %v180
      %v253 = vunpack.c.l.b16 %v181
      %v254 = vunpack.c.h.b16 %v181
      %v255 = vunpack.c.l.b16 %v182
      %v256 = vunpack.c.h.b16 %v182
      %v257 = vunpack.c.l.b16 %v183
      %v258 = vunpack.c.h.b16 %v183
      %v259 = vunpack.c.l.b16 %v184
      %v260 = vunpack.c.h.b16 %v184
      %v261 = vunpack.c.l.b16 %v185
      %v262 = vunpack.c.h.b16 %v185
      %v263 = vunpack.c.l.b16 %v186
      %v264 = vunpack.c.h.b16 %v186
      %v265 = vunpack.c.l.b16 %v187
      %v266 = vunpack.c.h.b16 %v187
      %v267 = vunpack.c.l.b16 %v188
      %v268 = vunpack.c.h.b16 %v188
      %v269 = vunpack.c.l.b16 %v189
      %v270 = vunpack.c.h.b16 %v189
      %v271 = vunpack.c.l.b16 %v190
      %v272 = vunpack.c.h.b16 %v190
      %v273 = vunpack.c.l.b16 %v191
      %v274 = vunpack.c.h.b16 %v191
      %v275 = vunpack.c.l.b16 %v192
      %v276 = vunpack.c.h.b16 %v192
      %v277 = vpack.c.b16 %v247, %v245
      %v278 = vpack.c.b16 %v248, %v246
      %v279 = vpack.c.b16 %v251, %v249
      %v280 = vpack.c.b16 %v252, %v250
      %v281 = vpack.c.b16 %v255, %v253
      %v282 = vpack.c.b16 %v256, %v254
      %v283 = vpack.c.b16 %v259, %v257
      %v284 = vpack.c.b16 %v260, %v258
      %v285 = vpack.c.b16 %v263, %v261
      %v286 = vpack.c.b16 %v264, %v262
      %v287 = vpack.c.b16 %v267, %v265
      %v288 = vpack.c.b16 %v268, %v266
      %v289 = vpack.c.b16 %v271, %v269
      %v290 = vpack.c.b16 %v272, %v270
      %v291 = vpack.c.b16 %v275, %v273
      %v292 = vpack.c.b16 %v276, %v274
      %v341 = vunpack.c.l.b16 %v193
      %v342 = vunpack.c.l.b16 %v194
      %v343 = vunpack.c.l.b16 %v195
      %v344 = vunpack.c.l.b16 %v196
      %v345 = vunpack.c.l.b16 %v197
      %v346 = vunpack.c.l.b16 %v198
      %v347 = vunpack.c.l.b16 %v199
      %v348 = vunpack.c.l.b16 %v200
      %v349 = vunpack.c.l.b16 %v201
      %v350 = vunpack.c.l.b16 %v202
      %v351 = vunpack.c.l.b16 %v203
      %v352 = vunpack.c.l.b16 %v204
      %v353 = vunpack.c.l.b16 %v205
      %v354 = vunpack.c.l.b16 %v206
      %v355 = vunpack.c.l.b16 %v207
      %v356 = vunpack.c.l.b16 %v208
      %v357 = vunpack.c.l.b16 %v209
      %v358 = vunpack.c.l.b16 %v210
      %v359 = vunpack.c.l.b16 %v211
      %v360 = vunpack.c.l.b16 %v212
      %v361 = vunpack.c.l.b16 %v213
      %v362 = vunpack.c.l.b16 %v214
      %v363 = vunpack.c.l.b16 %v215
      %v364 = vunpack.c.l.b16 %v216
      %v365 = vunpack.c.l.b16 %v217
      %v366 = vunpack.c.l.b16 %v218
      %v367 = vunpack.c.l.b16 %v219
      %v368 = vunpack.c.l.b16 %v220
      %v369 = vunpack.c.l.b16 %v221
      %v370 = vunpack.c.l.b16 %v222
      %v371 = vunpack.c.l.b16 %v223
      %v372 = vunpack.c.l.b16 %v224
      %v373 = vpack.c.b16 %v342, %v341
      %v374 = vpack.c.b16 %v344, %v343
      %v375 = vpack.c.b16 %v346, %v345
      %v376 = vpack.c.b16 %v348, %v347
      %v377 = vpack.c.b16 %v350, %v349
      %v378 = vpack.c.b16 %v352, %v351
      %v379 = vpack.c.b16 %v354, %v353
      %v380 = vpack.c.b16 %v356, %v355
      %v381 = vpack.c.b16 %v358, %v357
      %v382 = vpack.c.b16 %v360, %v359
      %v383 = vpack.c.b16 %v362, %v361
      %v384 = vpack.c.b16 %v364, %v363
      %v385 = vpack.c.b16 %v366, %v365
      %v386 = vpack.c.b16 %v368, %v367
      %v387 = vpack.c.b16 %v370, %v369
      %v388 = vpack.c.b16 %v372, %v371
      %405 = vmatpush.bf16.msra.mxu0 %v380
      %406 = vmatpush.bf16.msra.mxu0 %v379
      %407 = vmatpush.bf16.msra.mxu0 %v378
      %408 = vmatpush.bf16.msra.mxu0 %v377
      %409 = vmatpush.bf16.msra.mxu0 %v376
      %410 = vmatpush.bf16.msra.mxu0 %v375
      %411 = vmatpush.bf16.msra.mxu0 %v374
      %412 = vmatpush.bf16.msra.mxu0 %v373
      %413 = vmatmul.bf16.gmra.mxu0 %v277
      %v414 = vpop.f32.mrf.mxu0
      %v415 = vadd.f32 %v227, %v414
      %v416 = vpop.f32.mrf.mxu0
      %v417 = vadd.f32 %v227, %v416
      %418 = vmatmul.bf16.gmra.mxu0 %v279
      %v419 = vpop.f32.mrf.mxu0
      %v420 = vadd.f32 %v227, %v419
      %v421 = vpop.f32.mrf.mxu0
      %v422 = vadd.f32 %v227, %v421
      %423 = vmatmul.bf16.gmra.mxu0 %v281
      %v424 = vpop.f32.mrf.mxu0
      %v425 = vadd.f32 %v227, %v424
      %v426 = vpop.f32.mrf.mxu0
      %v427 = vadd.f32 %v227, %v426
      %428 = vmatmul.bf16.gmra.mxu0 %v283
      %v429 = vpop.f32.mrf.mxu0
      %v430 = vadd.f32 %v227, %v429
      %v431 = vpop.f32.mrf.mxu0
      %v432 = vadd.f32 %v227, %v431
      %433 = vmatmul.bf16.gmra.mxu0 %v285
      %v434 = vpop.f32.mrf.mxu0
      %v435 = vadd.f32 %v227, %v434
      %v436 = vpop.f32.mrf.mxu0
      %v437 = vadd.f32 %v227, %v436
      %438 = vmatmul.bf16.gmra.mxu0 %v287
      %v439 = vpop.f32.mrf.mxu0
      %v440 = vadd.f32 %v227, %v439
      %v441 = vpop.f32.mrf.mxu0
      %v442 = vadd.f32 %v227, %v441
      %443 = vmatmul.bf16.gmra.mxu0 %v289
      %v444 = vpop.f32.mrf.mxu0
      %v445 = vadd.f32 %v227, %v444
      %v446 = vpop.f32.mrf.mxu0
      %v447 = vadd.f32 %v227, %v446
      %448 = vmatmul.bf16.gmra.mxu0 %v291
      %v449 = vpop.f32.mrf.mxu0
      %v450 = vadd.f32 %v227, %v449
      %v451 = vpop.f32.mrf.mxu0
      %v452 = vadd.f32 %v227, %v451
      %453 = vdwg.mxu0
      %454 = vmatpush.bf16.msra.mxu0 %v388
      %455 = vmatpush.bf16.msra.mxu0 %v387
      %456 = vmatpush.bf16.msra.mxu0 %v386
      %457 = vmatpush.bf16.msra.mxu0 %v385
      %458 = vmatpush.bf16.msra.mxu0 %v384
      %459 = vmatpush.bf16.msra.mxu0 %v383
      %460 = vmatpush.bf16.msra.mxu0 %v382
      %461 = vmatpush.bf16.msra.mxu0 %v381
      %462 = vmatmul.bf16.gmra.mxu0 %v278
      %v463 = vpop.f32.mrf.mxu0
      %v464 = vadd.f32 %v415, %v463
      %v465 = vpop.f32.mrf.mxu0
      %v466 = vadd.f32 %v417, %v465
      %467 = vmatmul.bf16.gmra.mxu0 %v280
      %v468 = vpop.f32.mrf.mxu0
      %v469 = vadd.f32 %v420, %v468
      %v470 = vpop.f32.mrf.mxu0
      %v471 = vadd.f32 %v422, %v470
      %472 = vmatmul.bf16.gmra.mxu0 %v282
      %v473 = vpop.f32.mrf.mxu0
      %v474 = vadd.f32 %v425, %v473
      %v475 = vpop.f32.mrf.mxu0
      %v476 = vadd.f32 %v427, %v475
      %477 = vmatmul.bf16.gmra.mxu0 %v284
      %v478 = vpop.f32.mrf.mxu0
      %v479 = vadd.f32 %v430, %v478
      %v480 = vpop.f32.mrf.mxu0
      %v481 = vadd.f32 %v432, %v480
      %482 = vmatmul.bf16.gmra.mxu0 %v286
      %v483 = vpop.f32.mrf.mxu0
      %v484 = vadd.f32 %v435, %v483
      %v485 = vpop.f32.mrf.mxu0
      %v486 = vadd.f32 %v437, %v485
      %487 = vmatmul.bf16.gmra.mxu0 %v288
      %v488 = vpop.f32.mrf.mxu0
      %v489 = vadd.f32 %v440, %v488
      %v490 = vpop.f32.mrf.mxu0
      %v491 = vadd.f32 %v442, %v490
      %492 = vmatmul.bf16.gmra.mxu0 %v290
      %v493 = vpop.f32.mrf.mxu0
      %v494 = vadd.f32 %v445, %v493
      %v495 = vpop.f32.mrf.mxu0
      %v496 = vadd.f32 %v447, %v495
      %497 = vmatmul.bf16.gmra.mxu0 %v292
      %v498 = vpop.f32.mrf.mxu0
      %v499 = vadd.f32 %v450, %v498
      %v500 = vpop.f32.mrf.mxu0
      %v501 = vadd.f32 %v452, %v500
      %502 = vdwg.mxu0
      %v503 = vlaneseq
      %v504 = vand.u32 %v503, 127
      %vm505 = vcmp.lt.s32.totalorder %v504, 7
      %v506 = vsel %vm505, %v464, -inf
      %v507 = vsel %vm505, %v466, -inf
      %v508 = vsel %vm505, %v469, -inf
      %v509 = vsel %vm505, %v471, -inf
      %v510 = vsel %vm505, %v474, -inf
      %v511 = vsel %vm505, %v476, -inf
      %v512 = vsel %vm505, %v479, -inf
      %v513 = vsel %vm505, %v481, -inf
      %v514 = vsel %vm505, %v484, -inf
      %v515 = vsel %vm505, %v486, -inf
      %v516 = vsel %vm505, %v489, -inf
      %v517 = vsel %vm505, %v491, -inf
      %v518 = vsel %vm505, %v494, -inf
      %v519 = vsel %vm505, %v496, -inf
      %v520 = vsel %vm505, %v499, -inf
      %v521 = vsel %vm505, %v501, -inf
      %522 = vmax.xlane.f32.xlu0 %v506
      %v523 = vpop.xlane.xlu0 %522
      %524 = vmax.xlane.f32.xlu0 %v507
      %v525 = vpop.xlane.xlu0 %524
      %526 = vmax.xlane.f32.xlu0 %v508
      %v527 = vpop.xlane.xlu0 %526
      %528 = vmax.xlane.f32.xlu0 %v509
      %v529 = vpop.xlane.xlu0 %528
      %530 = vmax.xlane.f32.xlu0 %v510
      %v531 = vpop.xlane.xlu0 %530
      %532 = vmax.xlane.f32.xlu0 %v511
      %v533 = vpop.xlane.xlu0 %532
      %534 = vmax.xlane.f32.xlu0 %v512
      %v535 = vpop.xlane.xlu0 %534
      %536 = vmax.xlane.f32.xlu0 %v513
      %v537 = vpop.xlane.xlu0 %536
      %538 = vmax.xlane.f32.xlu0 %v514
      %v539 = vpop.xlane.xlu0 %538
      %540 = vmax.xlane.f32.xlu0 %v515
      %v541 = vpop.xlane.xlu0 %540
      %542 = vmax.xlane.f32.xlu0 %v516
      %v543 = vpop.xlane.xlu0 %542
      %544 = vmax.xlane.f32.xlu0 %v517
      %v545 = vpop.xlane.xlu0 %544
      %546 = vmax.xlane.f32.xlu0 %v518
      %v547 = vpop.xlane.xlu0 %546
      %548 = vmax.xlane.f32.xlu0 %v519
      %v549 = vpop.xlane.xlu0 %548
      %550 = vmax.xlane.f32.xlu0 %v520
      %v551 = vpop.xlane.xlu0 %550
      %552 = vmax.xlane.f32.xlu0 %v521
      %v553 = vpop.xlane.xlu0 %552
      %v554 = vsub.f32 %v506, %v523
      %v555 = vsub.f32 %v507, %v525
      %v556 = vsub.f32 %v508, %v527
      %v557 = vsub.f32 %v509, %v529
      %v558 = vsub.f32 %v510, %v531
      %v559 = vsub.f32 %v511, %v533
      %v560 = vsub.f32 %v512, %v535
      %v561 = vsub.f32 %v513, %v537
      %v562 = vsub.f32 %v514, %v539
      %v563 = vsub.f32 %v515, %v541
      %v564 = vsub.f32 %v516, %v543
      %v565 = vsub.f32 %v517, %v545
      %v566 = vsub.f32 %v518, %v547
      %v567 = vsub.f32 %v519, %v549
      %v568 = vsub.f32 %v520, %v551
      %v569 = vsub.f32 %v521, %v553
      %v570 = vmul.f32 %v554, 1.442695
      %v571 = vpow.pop %v570
      %v572 = vmul.f32 %v555, 1.442695
      %v573 = vpow.pop %v572
      %v574 = vmul.f32 %v556, 1.442695
      %v575 = vpow.pop %v574
      %v576 = vmul.f32 %v557, 1.442695
      %v577 = vpow.pop %v576
      %v578 = vmul.f32 %v558, 1.442695
      %v579 = vpow.pop %v578
      %v580 = vmul.f32 %v559, 1.442695
      %v581 = vpow.pop %v580
      %v582 = vmul.f32 %v560, 1.442695
      %v583 = vpow.pop %v582
      %v584 = vmul.f32 %v561, 1.442695
      %v585 = vpow.pop %v584
      %v586 = vmul.f32 %v562, 1.442695
      %v587 = vpow.pop %v586
      %v588 = vmul.f32 %v563, 1.442695
      %v589 = vpow.pop %v588
      %v590 = vmul.f32 %v564, 1.442695
      %v591 = vpow.pop %v590
      %v592 = vmul.f32 %v565, 1.442695
      %v593 = vpow.pop %v592
      %v594 = vmul.f32 %v566, 1.442695
      %v595 = vpow.pop %v594
      %v596 = vmul.f32 %v567, 1.442695
      %v597 = vpow.pop %v596
      %v598 = vmul.f32 %v568, 1.442695
      %v599 = vpow.pop %v598
      %v600 = vmul.f32 %v569, 1.442695
      %v601 = vpow.pop %v600
      %602 = vadd.xlane.f32.xlu0 %v571
      %v603 = vpop.xlane.xlu0 %602
      %604 = vadd.xlane.f32.xlu0 %v573
      %v605 = vpop.xlane.xlu0 %604
      %606 = vadd.xlane.f32.xlu0 %v575
      %v607 = vpop.xlane.xlu0 %606
      %608 = vadd.xlane.f32.xlu0 %v577
      %v609 = vpop.xlane.xlu0 %608
      %610 = vadd.xlane.f32.xlu0 %v579
      %v611 = vpop.xlane.xlu0 %610
      %612 = vadd.xlane.f32.xlu0 %v581
      %v613 = vpop.xlane.xlu0 %612
      %614 = vadd.xlane.f32.xlu0 %v583
      %v615 = vpop.xlane.xlu0 %614
      %616 = vadd.xlane.f32.xlu0 %v585
      %v617 = vpop.xlane.xlu0 %616
      %618 = vadd.xlane.f32.xlu0 %v587
      %v619 = vpop.xlane.xlu0 %618
      %620 = vadd.xlane.f32.xlu0 %v589
      %v621 = vpop.xlane.xlu0 %620
      %622 = vadd.xlane.f32.xlu0 %v591
      %v623 = vpop.xlane.xlu0 %622
      %624 = vadd.xlane.f32.xlu0 %v593
      %v625 = vpop.xlane.xlu0 %624
      %626 = vadd.xlane.f32.xlu0 %v595
      %v627 = vpop.xlane.xlu0 %626
      %628 = vadd.xlane.f32.xlu0 %v597
      %v629 = vpop.xlane.xlu0 %628
      %630 = vadd.xlane.f32.xlu0 %v599
      %v631 = vpop.xlane.xlu0 %630
      %632 = vadd.xlane.f32.xlu0 %v601
      %v633 = vpop.xlane.xlu0 %632
      %v634 = vlog2.pop %v603
      %v635 = vmul.f32 %v634, 0.6931472
      %v636 = vlog2.pop %v605
      %v637 = vmul.f32 %v636, 0.6931472
      %v638 = vlog2.pop %v607
      %v639 = vmul.f32 %v638, 0.6931472
      %v640 = vlog2.pop %v609
      %v641 = vmul.f32 %v640, 0.6931472
      %v642 = vlog2.pop %v611
      %v643 = vmul.f32 %v642, 0.6931472
      %v644 = vlog2.pop %v613
      %v645 = vmul.f32 %v644, 0.6931472
      %v646 = vlog2.pop %v615
      %v647 = vmul.f32 %v646, 0.6931472
      %v648 = vlog2.pop %v617
      %v649 = vmul.f32 %v648, 0.6931472
      %v650 = vlog2.pop %v619
      %v651 = vmul.f32 %v650, 0.6931472
      %v652 = vlog2.pop %v621
      %v653 = vmul.f32 %v652, 0.6931472
      %v654 = vlog2.pop %v623
      %v655 = vmul.f32 %v654, 0.6931472
      %v656 = vlog2.pop %v625
      %v657 = vmul.f32 %v656, 0.6931472
      %v658 = vlog2.pop %v627
      %v659 = vmul.f32 %v658, 0.6931472
      %v660 = vlog2.pop %v629
      %v661 = vmul.f32 %v660, 0.6931472
      %v662 = vlog2.pop %v631
      %v663 = vmul.f32 %v662, 0.6931472
      %v664 = vlog2.pop %v633
      %v665 = vmul.f32 %v664, 0.6931472
      %v666 = vsub.f32 %v554, %v635
      %v667 = vsub.f32 %v555, %v637
      %v668 = vsub.f32 %v556, %v639
      %v669 = vsub.f32 %v557, %v641
      %v670 = vsub.f32 %v558, %v643
      %v671 = vsub.f32 %v559, %v645
      %v672 = vsub.f32 %v560, %v647
      %v673 = vsub.f32 %v561, %v649
      %v674 = vsub.f32 %v562, %v651
      %v675 = vsub.f32 %v563, %v653
      %v676 = vsub.f32 %v564, %v655
      %v677 = vsub.f32 %v565, %v657
      %v678 = vsub.f32 %v566, %v659
      %v679 = vsub.f32 %v567, %v661
      %v680 = vsub.f32 %v568, %v663
      %v681 = vsub.f32 %v569, %v665
      %682 = vst [vmem:[%s175] sm:$0xff] %v666
      %683 = vst [vmem:[%s175 + $0x8] sm:$0xff] %v667
      %684 = vst [vmem:[%s175 + $0x10] sm:$0xff] %v668
      %685 = vst [vmem:[%s175 + $0x18] sm:$0xff] %v669
      %686 = vst [vmem:[%s175 + $0x20] sm:$0xff] %v670
      %687 = vst [vmem:[%s175 + $0x28] sm:$0xff] %v671
      %688 = vst [vmem:[%s175 + $0x30] sm:$0xff] %v672
      %689 = vst [vmem:[%s175 + $0x38] sm:$0xff] %v673
      %690 = vst [vmem:[%s175 + $0x40] sm:$0xff] %v674
      %691 = vst [vmem:[%s175 + $0x48] sm:$0xff] %v675
      %692 = vst [vmem:[%s175 + $0x50] sm:$0xff] %v676
      %693 = vst [vmem:[%s175 + $0x58] sm:$0xff] %v677
      %694 = vst [vmem:[%s175 + $0x60] sm:$0xff] %v678
      %695 = vst [vmem:[%s175 + $0x68] sm:$0xff] %v679
      %696 = vst [vmem:[%s175 + $0x70] sm:$0xff] %v680
      %697 = vst [vmem:[%s175 + $0x78] sm:$0xff] %v681
      %s698 = smul.u32 16, %s14
      %p699 = scmp.lt.s32.totalorder %s698, 31
      %s700 = scalar_select %p699, %s698, 31
      %s701 = smul.addr %s700, 8
      %s702 = scalar_lea.vmem %s3, %s701
      // Predicated region
      $region33: #{gcn_forward_padded.7} parent=31 // pred_check
        %p703 = pneg %p100
      $region34: #{gcn_forward_padded.7} parent=31 // pred_check_branch
        %705 = sbr.rel (%p703) target = $region36
      $region35: #{gcn_forward_padded.7} parent=31 // pred_region
        %s706 = smul.u32 16, %s14
      $region36: #{gcn_forward_padded.7} parent=31 // pred_fallthru
        _
    $region32: #{gcn_forward_padded.7} parent=5 // pred_fallthru
      _
    %p707 = scmp.le.s32.totalorder 2, %s9
    // Predicated region
    $region37: #{gcn_forward_padded.7} parent=5 // pred_check
      %p708 = pneg %p707
    $region38: #{gcn_forward_padded.7} parent=5 // pred_check_branch
      %710 = sbr.rel (%p708) target = $region40
    $region39: #{gcn_forward_padded.7} parent=5 // pred_region
      %s711 = ssub.s32 %s9, 2
      // Predicated region
      $region41: #{gcn_forward_padded.7} parent=39 // pred_check
        %p712 = pneg %p106
      $region42: #{gcn_forward_padded.7} parent=39 // pred_check_branch
        %714 = sbr.rel (%p712) target = $region44
      $region43: #{gcn_forward_padded.7} parent=39 // pred_region
        %s715 = smul.u32 16, %s15
        %p716 = scmp.lt.s32.totalorder %s715, 31
        %s717 = scalar_select %p716, %s715, 31
        %s718 = smul.addr %s717, 8
        %s719 = scalar_lea.vmem %s3, %s718
      $region44: #{gcn_forward_padded.7} parent=39 // pred_fallthru
        _
    $region40: #{gcn_forward_padded.7} parent=5 // pred_fallthru
      _
  $region6: #{gcn_forward_padded.7} parent=0 // loop_footer
    %s13 = sadd.s32 1, %s9
  $region7: #{gcn_forward_padded.7} parent=0 // loop_footer_branch
    %8 = sbr.rel target = $region3
  $region8: #{gcn_forward_padded.7} parent=0 // loop_exit
    _

</llo_original>
